<compile_context>
chip_gen: v7x
topology: tpu7x:2x2x1
jax: 0.10.0
libtpu: 0.0.40
codegen_flags: <defaults>
</compile_context>

<pallas_src>
import functools
import numpy as np
import jax
import jax.numpy as jnp
from jax import lax
from jax.experimental import pallas as pl
from jax.experimental.pallas import tpu as pltpu


def _vat_kernel(x_ref, d0_ref, w_ref, b_ref, out_ref, *, C, HW, xi, eps, ip, inv_n):
    """One batch tile: x/d0 (TN, D) f32, W (D, K) bf16, b (1, K) f32, out (1, 1, 128)."""
    w_bf = w_ref[...]                       # bf16 MXU operand, resident across the grid
    b = b_ref[...]                          # (1, K) f32
    d0 = d0_ref[...]                        # (TN, D) f32

    def dot_w(a):                           # (TN, D) @ (D, K): bf16 MXU, f32 accumulate
        return jnp.dot(a.astype(jnp.bfloat16), w_bf,
                       preferred_element_type=jnp.float32)

    def log_softmax(z):                     # over the class axis (torch dim=1)
        s = z - jnp.max(z, axis=1, keepdims=True)
        return s - jnp.log(jnp.sum(jnp.exp(s), axis=1, keepdims=True))

    def normalize_channel(d):
        # torch F.normalize(d, p=2, dim=1, eps=1e-12) on NCHW: per-(n,h,w) L2 over C.
        # Channel c lives in the lane-aligned chunk [c*HW, (c+1)*HW) (HW % 128 == 0).
        nsq = d[:, 0:HW] * d[:, 0:HW]
        for c in range(1, C):
            p = d[:, c * HW:(c + 1) * HW]
            nsq = nsq + p * p
        # EUP approx reciprocal (free slot) + ONE full-width VPU multiply instead of
        # C divides + a lane-wise concatenate.
        inv = pl.reciprocal(jnp.maximum(jnp.sqrt(nsq), 1e-12), approx=True)  # (TN, HW)
        return d * jnp.tile(inv, (1, C))

    # model(x) = x@W + b computed exactly once (bias hoisted); every perturbed forward
    # reuses z0 + s * (d @ W) — no (TN, D) "x + perturbation" temporaries.
    z0 = dot_w(x_ref[...]) + b              # (TN, K)
    logp0 = log_softmax(z0)
    pred = jnp.exp(logp0)                   # no_grad softmax(model(x))

    d = normalize_channel(d0)               # d = normalize(rand(x.shape))

    def power_iter(_, d):
        logph = log_softmax(z0 + xi * dot_w(d))
        grad_z = (jnp.exp(logph) - pred) * inv_n          # d KL_batchmean / d z_hat
        # d z_hat / d(perturbation) == xi * W; the xi factor is dropped because
        # normalize() is scale-invariant (saves a (TN, D)-wide multiply).
        grad_x = lax.dot_general(grad_z.astype(jnp.bfloat16), w_bf,
                                 (((1,), (1,)), ((), ())),
                                 preferred_element_type=jnp.float32)          # (TN, D)
        return normalize_channel(grad_x)

    # fori_loop keeps a single-iteration live range even when ip > 1.
    d = lax.fori_loop(0, ip, power_iter, d, unroll=True)

    # lds partial: sum over this tile of pred * (log pred - log_softmax(model(x+eps*d)))
    logpf = log_softmax(z0 + eps * dot_w(d))
    part_sum = jnp.sum(pred * (logp0 - logpf))
    # Lane-dense full-block store (unmasked vst); the wrapper reads lane 0.
    out_ref[...] = jnp.full(out_ref.shape, part_sum, dtype=jnp.float32)


def _pick_batch_tile(N, D):
    """Largest multiple-of-8 batch tile whose double-buffered f32 x/d0 tiles fit well
    inside every generation's scoped-VMEM default (16 MiB v5e, 32 MiB v6e/v7x; v7x has
    only 64 MiB physical VMEM, so stay conservative)."""
    budget_bytes = 12 << 20                       # 2 inputs x 2 pipeline buffers budget
    tn = (budget_bytes // (2 * 2 * D * 4)) // 8 * 8
    tn = int(max(8, min(256, tn)))
    return N if N <= tn else tn


def vat_loss_pallas(x_nchw, d0_nchw, W, b, *, xi=0.1, eps=0.1, ip=1):
    N, C, H, Wd = x_nchw.shape
    HW = H * Wd
    D = C * HW
    K = W.shape[1]
    assert HW % 128 == 0, "H*W must be a multiple of 128 for lane-aligned channel normalization"

    # Glue: row-major NCHW flatten == torch x.view(N, -1).
    x_flat = x_nchw.reshape(N, D).astype(jnp.float32)
    d_flat = d0_nchw.reshape(N, D).astype(jnp.float32)
    w_bf = W.astype(jnp.bfloat16)                 # MXU-only operand; halves W HBM bytes
    b2 = b.reshape(1, K).astype(jnp.float32)

    tn = _pick_batch_tile(N, D)
    g = pl.cdiv(N, tn)
    n_pad = g * tn
    if n_pad != N:
        # Zero rows are exact no-ops: d0 == 0 normalizes to 0, so z_f == z_0 and the
        # padded rows contribute exactly 0 to the KL partial sums.
        x_flat = jnp.pad(x_flat, ((0, n_pad - N), (0, 0)))
        d_flat = jnp.pad(d_flat, ((0, n_pad - N), (0, 0)))

    kernel = functools.partial(_vat_kernel, C=C, HW=HW, xi=float(xi), eps=float(eps),
                               ip=int(ip), inv_n=1.0 / N)
    partials = pl.pallas_call(
        kernel,
        grid=(g,),
        in_specs=[
            pl.BlockSpec((tn, D), lambda i: (i, 0)),   # x tile (auto double-buffered)
            pl.BlockSpec((tn, D), lambda i: (i, 0)),   # d0 tile (auto double-buffered)
            pl.BlockSpec((D, K), lambda i: (0, 0)),    # W resident (constant block)
            pl.BlockSpec((1, K), lambda i: (0, 0)),    # b resident
        ],
        out_specs=pl.BlockSpec((1, 1, 128), lambda i: (i, 0, 0)),
        out_shape=jax.ShapeDtypeStruct((g, 1, 128), jnp.float32),
        compiler_params=pltpu.CompilerParams(dimension_semantics=("parallel",)),
    )(x_flat, d_flat, w_bf, b2)

    # batchmean: partial sums are reduced here (not in an accumulator axis) so the
    # batch grid stays "parallel" and can shard across v7x's two TensorCores.
    return jnp.sum(partials[:, 0, 0]) / N


def vat_loss_ref(x_nchw, d0_nchw, W, b, *, xi=0.1, eps=0.1, ip=1):
    """Pure-JAX, full-f32 reference mirroring the torch semantics (sanity check)."""
    N = x_nchw.shape[0]
    D = x_nchw.size // N

    def model(xf):
        return xf.reshape(N, D) @ W + b[None, :]

    def log_softmax(z):
        z = z - jnp.max(z, axis=1, keepdims=True)
        return z - jnp.log(jnp.sum(jnp.exp(z), axis=1, keepdims=True))

    def normalize(d):                    # F.normalize over dim=1 of NCHW
        nrm = jnp.sqrt(jnp.sum(d * d, axis=1, keepdims=True))
        return d / jnp.maximum(nrm, 1e-12)

    logp0 = log_softmax(model(x_nchw))
    pred = jnp.exp(logp0)
    d = normalize(d0_nchw)
    for _ in range(ip):
        logph = log_softmax(model(x_nchw + xi * d))
        grad_z = (jnp.exp(logph) - pred) / N
        grad_x = (grad_z @ W.T).reshape(x_nchw.shape)
        d = normalize(xi * grad_x)
    logpf = log_softmax(model(x_nchw + eps * d))
    return jnp.sum(pred * (logp0 - logpf)) / N


if __name__ == "__main__":
    # Small shapes: batch=2, channels=4, spatial=16x16, num_classes=10.
    N, C, H, Wd, K = 2, 4, 16, 16, 10
    D = C * H * Wd
    xi, eps, ip = 0.1, 0.1, 1     # VATLoss defaults

    key = jax.random.PRNGKey(0)
    kx, kd, kw, kb = jax.random.split(key, 4)
    x = jax.random.normal(kx, (N, C, H, Wd), dtype=jnp.float32)
    # stands in for torch.rand(x.shape): uniform [0, 1)
    d0 = jax.random.uniform(kd, (N, C, H, Wd), dtype=jnp.float32)
    # deterministic synthetic linear "model" parameters
    W = jax.random.normal(kw, (D, K), dtype=jnp.float32) / jnp.sqrt(jnp.float32(D))
    b = 0.01 * jax.random.normal(kb, (K,), dtype=jnp.float32)

    lds = vat_loss_pallas(x, d0, W, b, xi=xi, eps=eps, ip=ip)
    jax.block_until_ready(lds)

    lds_ref = vat_loss_ref(x, d0, W, b, xi=xi, eps=eps, ip=ip)
    # bf16 MXU operands + approx-reciprocal normalization vs. a full-f32 reference:
    # expect ~1% relative difference, so compare with a correspondingly loose tolerance.
    np.testing.assert_allclose(np.asarray(lds), np.asarray(lds_ref),
                               rtol=5e-2, atol=1e-4)
    print("KERNEL_OK")
</pallas_src>

<mosaic_0001>
module attributes {stable_mosaic.version = 11 : i64} {
  func.func @_vat_kernel(%arg0: i32, %arg1: memref<2x1024xf32, #tpu.memory_space<vmem>>, %arg2: memref<2x1024xf32, #tpu.memory_space<vmem>>, %arg3: memref<1024x10xbf16, #tpu.memory_space<vmem>>, %arg4: memref<1x10xf32, #tpu.memory_space<vmem>>, %arg5: memref<1x1x128xf32, #tpu.memory_space<vmem>>) attributes {dimension_semantics = [#tpu.dimension_semantics<parallel>], iteration_bounds = array<i64: 1>, scalar_prefetch = 0 : i64, scratch_operands = 0 : i64, tpu.core_type = #tpu.core_type<tc>, window_params = [{transform_indices = @transform_0, window_bounds = array<i64: 2, 1024>}, {transform_indices = @transform_1, window_bounds = array<i64: 2, 1024>}, {pipeline_mode = #tpu.pipeline_mode<synchronous>, transform_indices = @transform_2, window_bounds = array<i64: 1024, 10>}, {pipeline_mode = #tpu.pipeline_mode<synchronous>, transform_indices = @transform_3, window_bounds = array<i64: 1, 10>}, {transform_indices = @transform_4, window_bounds = array<i64: 1, 1, 128>}]} {
    %c0 = arith.constant 0 : index
    %c0_0 = arith.constant 0 : index
    %0 = vector.load %arg3[%c0, %c0_0] : memref<1024x10xbf16, #tpu.memory_space<vmem>>, vector<1024x10xbf16>
    %c0_1 = arith.constant 0 : index
    %c0_2 = arith.constant 0 : index
    %1 = vector.load %arg4[%c0_1, %c0_2] : memref<1x10xf32, #tpu.memory_space<vmem>>, vector<1x10xf32>
    %c0_3 = arith.constant 0 : index
    %c0_4 = arith.constant 0 : index
    %2 = vector.load %arg2[%c0_3, %c0_4] : memref<2x1024xf32, #tpu.memory_space<vmem>>, vector<2x1024xf32>
    %c0_5 = arith.constant 0 : index
    %c0_6 = arith.constant 0 : index
    %3 = vector.load %arg1[%c0_5, %c0_6] : memref<2x1024xf32, #tpu.memory_space<vmem>>, vector<2x1024xf32>
    %4 = arith.truncf %3 : vector<2x1024xf32> to vector<2x1024xbf16>
    %cst = arith.constant dense<0.000000e+00> : vector<2x10xf32>
    %5 = tpu.matmul %4, %0, %cst {dimension_numbers = #tpu.dot_dimension_numbers<[1], [0], [0], [1], [0, 0, 1, 1], [], []>} : vector<2x1024xbf16>, vector<1024x10xbf16>, vector<2x10xf32> -> vector<2x10xf32>
    %6 = vector.broadcast %1 : vector<1x10xf32> to vector<2x10xf32>
    %7 = arith.addf %5, %6 : vector<2x10xf32>
    %cst_7 = arith.constant dense<0xFF800000> : vector<2xf32>
    %8 = vector.multi_reduction <maximumf>, %7, %cst_7 [1] : vector<2x10xf32> to vector<2xf32>
    %9 = vector.shape_cast %8 : vector<2xf32> to vector<2x1xf32>
    %10 = vector.broadcast %9 : vector<2x1xf32> to vector<2x10xf32>
    %11 = arith.subf %7, %10 : vector<2x10xf32>
    %12 = math.exp %11 : vector<2x10xf32>
    %cst_8 = arith.constant dense<0.000000e+00> : vector<2xf32>
    %13 = vector.multi_reduction <add>, %12, %cst_8 [1] : vector<2x10xf32> to vector<2xf32>
    %14 = vector.shape_cast %13 : vector<2xf32> to vector<2x1xf32>
    %15 = math.log %14 : vector<2x1xf32>
    %16 = vector.broadcast %15 : vector<2x1xf32> to vector<2x10xf32>
    %17 = arith.subf %11, %16 : vector<2x10xf32>
    %18 = math.exp %17 : vector<2x10xf32>
    %19 = vector.extract_strided_slice %2 {offsets = [0, 0], sizes = [2, 256], strides = [1, 1]} : vector<2x1024xf32> to vector<2x256xf32>
    %20 = vector.extract_strided_slice %2 {offsets = [0, 0], sizes = [2, 256], strides = [1, 1]} : vector<2x1024xf32> to vector<2x256xf32>
    %21 = arith.mulf %19, %20 : vector<2x256xf32>
    %22 = vector.extract_strided_slice %2 {offsets = [0, 256], sizes = [2, 256], strides = [1, 1]} : vector<2x1024xf32> to vector<2x256xf32>
    %23 = arith.mulf %22, %22 : vector<2x256xf32>
    %24 = arith.addf %21, %23 : vector<2x256xf32>
    %25 = vector.extract_strided_slice %2 {offsets = [0, 512], sizes = [2, 256], strides = [1, 1]} : vector<2x1024xf32> to vector<2x256xf32>
    %26 = arith.mulf %25, %25 : vector<2x256xf32>
    %27 = arith.addf %24, %26 : vector<2x256xf32>
    %28 = vector.extract_strided_slice %2 {offsets = [0, 768], sizes = [2, 256], strides = [1, 1]} : vector<2x1024xf32> to vector<2x256xf32>
    %29 = arith.mulf %28, %28 : vector<2x256xf32>
    %30 = arith.addf %27, %29 : vector<2x256xf32>
    %31 = math.sqrt %30 : vector<2x256xf32>
    %cst_9 = arith.constant 9.99999996E-13 : f32
    %32 = vector.broadcast %cst_9 : f32 to vector<2x256xf32>
    %33 = arith.maximumf %31, %32 : vector<2x256xf32>
    %34 = tpu.reciprocal %33 {approx = true} : vector<2x256xf32> -> vector<2x256xf32>
    %35 = tpu.concatenate %34, %34, %34, %34 in 1 : vector<2x256xf32>, vector<2x256xf32>, vector<2x256xf32>, vector<2x256xf32> -> vector<2x1024xf32>
    %36 = arith.mulf %2, %35 : vector<2x1024xf32>
    %c0_i32 = arith.constant 0 : i32
    %37 = arith.truncf %36 : vector<2x1024xf32> to vector<2x1024xbf16>
    %cst_10 = arith.constant dense<0.000000e+00> : vector<2x10xf32>
    %38 = tpu.matmul %37, %0, %cst_10 {dimension_numbers = #tpu.dot_dimension_numbers<[1], [0], [0], [1], [0, 0, 1, 1], [], []>} : vector<2x1024xbf16>, vector<1024x10xbf16>, vector<2x10xf32> -> vector<2x10xf32>
    %cst_11 = arith.constant 1.000000e-01 : f32
    %39 = vector.broadcast %cst_11 : f32 to vector<2x10xf32>
    %40 = arith.mulf %39, %38 : vector<2x10xf32>
    %41 = arith.addf %7, %40 : vector<2x10xf32>
    %cst_12 = arith.constant dense<0xFF800000> : vector<2xf32>
    %42 = vector.multi_reduction <maximumf>, %41, %cst_12 [1] : vector<2x10xf32> to vector<2xf32>
    %43 = vector.shape_cast %42 : vector<2xf32> to vector<2x1xf32>
    %44 = vector.broadcast %43 : vector<2x1xf32> to vector<2x10xf32>
    %45 = arith.subf %41, %44 : vector<2x10xf32>
    %46 = math.exp %45 : vector<2x10xf32>
    %cst_13 = arith.constant dense<0.000000e+00> : vector<2xf32>
    %47 = vector.multi_reduction <add>, %46, %cst_13 [1] : vector<2x10xf32> to vector<2xf32>
    %48 = vector.shape_cast %47 : vector<2xf32> to vector<2x1xf32>
    %49 = math.log %48 : vector<2x1xf32>
    %50 = vector.broadcast %49 : vector<2x1xf32> to vector<2x10xf32>
    %51 = arith.subf %45, %50 : vector<2x10xf32>
    %52 = math.exp %51 : vector<2x10xf32>
    %53 = arith.subf %52, %18 : vector<2x10xf32>
    %cst_14 = arith.constant 5.000000e-01 : f32
    %54 = vector.broadcast %cst_14 : f32 to vector<2x10xf32>
    %55 = arith.mulf %53, %54 : vector<2x10xf32>
    %56 = arith.truncf %55 : vector<2x10xf32> to vector<2x10xbf16>
    %cst_15 = arith.constant dense<0.000000e+00> : vector<2x1024xf32>
    %57 = tpu.matmul %56, %0, %cst_15 {dimension_numbers = #tpu.dot_dimension_numbers<[1], [1], [0], [0], [0, 0, 1, 0], [], []>} : vector<2x10xbf16>, vector<1024x10xbf16>, vector<2x1024xf32> -> vector<2x1024xf32>
    %58 = vector.extract_strided_slice %57 {offsets = [0, 0], sizes = [2, 256], strides = [1, 1]} : vector<2x1024xf32> to vector<2x256xf32>
    %59 = vector.extract_strided_slice %57 {offsets = [0, 0], sizes = [2, 256], strides = [1, 1]} : vector<2x1024xf32> to vector<2x256xf32>
    %60 = arith.mulf %58, %59 : vector<2x256xf32>
    %61 = vector.extract_strided_slice %57 {offsets = [0, 256], sizes = [2, 256], strides = [1, 1]} : vector<2x1024xf32> to vector<2x256xf32>
    %62 = arith.mulf %61, %61 : vector<2x256xf32>
    %63 = arith.addf %60, %62 : vector<2x256xf32>
    %64 = vector.extract_strided_slice %57 {offsets = [0, 512], sizes = [2, 256], strides = [1, 1]} : vector<2x1024xf32> to vector<2x256xf32>
    %65 = arith.mulf %64, %64 : vector<2x256xf32>
    %66 = arith.addf %63, %65 : vector<2x256xf32>
    %67 = vector.extract_strided_slice %57 {offsets = [0, 768], sizes = [2, 256], strides = [1, 1]} : vector<2x1024xf32> to vector<2x256xf32>
    %68 = arith.mulf %67, %67 : vector<2x256xf32>
    %69 = arith.addf %66, %68 : vector<2x256xf32>
    %70 = math.sqrt %69 : vector<2x256xf32>
    %cst_16 = arith.constant 9.99999996E-13 : f32
    %71 = vector.broadcast %cst_16 : f32 to vector<2x256xf32>
    %72 = arith.maximumf %70, %71 : vector<2x256xf32>
    %73 = tpu.reciprocal %72 {approx = true} : vector<2x256xf32> -> vector<2x256xf32>
    %74 = tpu.concatenate %73, %73, %73, %73 in 1 : vector<2x256xf32>, vector<2x256xf32>, vector<2x256xf32>, vector<2x256xf32> -> vector<2x1024xf32>
    %75 = arith.mulf %57, %74 : vector<2x1024xf32>
    %76 = arith.truncf %75 : vector<2x1024xf32> to vector<2x1024xbf16>
    %cst_17 = arith.constant dense<0.000000e+00> : vector<2x10xf32>
    %77 = tpu.matmul %76, %0, %cst_17 {dimension_numbers = #tpu.dot_dimension_numbers<[1], [0], [0], [1], [0, 0, 1, 1], [], []>} : vector<2x1024xbf16>, vector<1024x10xbf16>, vector<2x10xf32> -> vector<2x10xf32>
    %cst_18 = arith.constant 1.000000e-01 : f32
    %78 = vector.broadcast %cst_18 : f32 to vector<2x10xf32>
    %79 = arith.mulf %78, %77 : vector<2x10xf32>
    %80 = arith.addf %7, %79 : vector<2x10xf32>
    %cst_19 = arith.constant dense<0xFF800000> : vector<2xf32>
    %81 = vector.multi_reduction <maximumf>, %80, %cst_19 [1] : vector<2x10xf32> to vector<2xf32>
    %82 = vector.shape_cast %81 : vector<2xf32> to vector<2x1xf32>
    %83 = vector.broadcast %82 : vector<2x1xf32> to vector<2x10xf32>
    %84 = arith.subf %80, %83 : vector<2x10xf32>
    %85 = math.exp %84 : vector<2x10xf32>
    %cst_20 = arith.constant dense<0.000000e+00> : vector<2xf32>
    %86 = vector.multi_reduction <add>, %85, %cst_20 [1] : vector<2x10xf32> to vector<2xf32>
    %87 = vector.shape_cast %86 : vector<2xf32> to vector<2x1xf32>
    %88 = math.log %87 : vector<2x1xf32>
    %89 = vector.broadcast %88 : vector<2x1xf32> to vector<2x10xf32>
    %90 = arith.subf %84, %89 : vector<2x10xf32>
    %91 = arith.subf %17, %90 : vector<2x10xf32>
    %92 = arith.mulf %18, %91 : vector<2x10xf32>
    %93 = vector.shape_cast %92 : vector<2x10xf32> to vector<1x2x10xf32>
    %cst_21 = arith.constant dense<0.000000e+00> : vector<1xf32>
    %94 = vector.multi_reduction <add>, %93, %cst_21 [1, 2] : vector<1x2x10xf32> to vector<1xf32>
    %95 = vector.shape_cast %94 : vector<1xf32> to vector<1x1x1xf32>
    %96 = vector.extract %95[0, 0, 0] : f32 from vector<1x1x1xf32>
    %97 = vector.broadcast %96 : f32 to vector<1x1x128xf32>
    %c0_22 = arith.constant 0 : index
    %c0_23 = arith.constant 0 : index
    %c0_24 = arith.constant 0 : index
    %98 = vector.load %arg5[%c0_22, %c0_23, %c0_24] : memref<1x1x128xf32, #tpu.memory_space<vmem>>, vector<1x1x128xf32>
    tpu.vector_store %arg5[%c0_22, %c0_23, %c0_24], %97 {strides = array<i32>} : memref<1x1x128xf32, #tpu.memory_space<vmem>>, vector<1x1x128xf32>,
    return
  }
  func.func @transform_0(%arg0: i32) -> (i32, i32) {
    %c0_i32 = arith.constant 0 : i32
    %c0_i32_0 = arith.constant 0 : i32
    return %arg0, %c0_i32 : i32, i32
  }
  func.func @transform_1(%arg0: i32) -> (i32, i32) {
    %c0_i32 = arith.constant 0 : i32
    %c0_i32_0 = arith.constant 0 : i32
    return %arg0, %c0_i32 : i32, i32
  }
  func.func @transform_2(%arg0: i32) -> (i32, i32) {
    %c0_i32 = arith.constant 0 : i32
    %c0_i32_0 = arith.constant 0 : i32
    %c0_i32_1 = arith.constant 0 : i32
    return %c0_i32, %c0_i32_0 : i32, i32
  }
  func.func @transform_3(%arg0: i32) -> (i32, i32) {
    %c0_i32 = arith.constant 0 : i32
    %c0_i32_0 = arith.constant 0 : i32
    %c0_i32_1 = arith.constant 0 : i32
    return %c0_i32, %c0_i32_0 : i32, i32
  }
  func.func @transform_4(%arg0: i32) -> (i32, i32, i32) {
    %c0_i32 = arith.constant 0 : i32
    %c0_i32_0 = arith.constant 0 : i32
    %c0_i32_1 = arith.constant 0 : i32
    return %arg0, %c0_i32, %c0_i32_0 : i32, i32, i32
  }
}

</mosaic_0001>

<llo_original>
// kernel: tpu_custom_call.1
$region0: #{tpu_custom_call.1}
  #allocation0 [shape = 'u32[]', space=smem, size = 0x4, offset = 0x4, fixed_abs, tag = 'smem constant byte address 0x4 - core index']
  #allocation1 [shape = 'u32[144,128]{1,0:T(1,128)}', space=vmem, size = 0x12000, scoped, tag = 'internal scratch']
  %s0 = inlined_call_operand.vmem [shape: f32[2,1024], index: 0, kind: input, shape index: {}]
  %s1 = inlined_call_operand.vmem [shape: f32[2,1024], index: 1, kind: input, shape index: {}]
  %s2 = inlined_call_operand.vmem [shape: bf16[1024,10], index: 2, kind: input, shape index: {}]
  %s3 = inlined_call_operand.vmem [shape: f32[1,10], index: 3, kind: input, shape index: {}]
  %s4 = inlined_call_operand.hbm [shape: f32[1,1,128], index: 4, kind: output, shape index: {}]
  %s5 = sld [smem:[#allocation0]]
  $region26: #{tpu_custom_call.1} parent=0
    _
  %s7 = ssub.s32 1, %s5
  %s8 = scalar_select 0, %s7, %s5
  $region1: #{tpu_custom_call.1} parent=0
    #allocation2 [shape = 'u8[512]{0}', space=vmem, size = 0x400, scoped, tag = 'output window, operand 0, single buffered']
    #allocation3 [shape = 's32[1]{0}', space=sflag, size = 0x4, scoped, tag = 'scoped memory for tpu_custom_call.1']
    %9 = vsyncpa [#allocation3], 0
    // Predicated region
    $region2: #{tpu_custom_call.1} parent=1 // pred_check
      _
    $region3: #{tpu_custom_call.1} parent=1 // pred_check_branch
      %11 = sbr.rel (0) target = $region5
    $region4: #{tpu_custom_call.1} parent=1 // pred_region
      _
    $region5: #{tpu_custom_call.1} parent=1 // pred_fallthru
      _
    // Predicated region
    $region6: #{tpu_custom_call.1} parent=1 // pred_check
      _
    $region7: #{tpu_custom_call.1} parent=1 // pred_check_branch
      %13 = sbr.rel (0) target = $region9
    $region8: #{tpu_custom_call.1} parent=1 // pred_region
      _
    $region9: #{tpu_custom_call.1} parent=1 // pred_fallthru
      _
    // Predicated region
    $region10: #{tpu_custom_call.1} parent=1 // pred_check
      _
    $region11: #{tpu_custom_call.1} parent=1 // pred_check_branch
      %15 = sbr.rel (0) target = $region13
    $region12: #{tpu_custom_call.1} parent=1 // pred_region
      _
    $region13: #{tpu_custom_call.1} parent=1 // pred_fallthru
      _
    // Predicated region
    $region14: #{tpu_custom_call.1} parent=1 // pred_check
      _
    $region15: #{tpu_custom_call.1} parent=1 // pred_check_branch
      %17 = sbr.rel (0) target = $region17
    $region16: #{tpu_custom_call.1} parent=1 // pred_region
      _
    $region17: #{tpu_custom_call.1} parent=1 // pred_fallthru
      _
    %v19 = vld [vmem:[%s2] sm:$0xf]
    %v20 = vld [vmem:[%s2 + $0x4] sm:$0xf]
    %v21 = vld [vmem:[%s2 + $0x8] sm:$0xf]
    %v22 = vld [vmem:[%s2 + $0xc] sm:$0xf]
    %v23 = vld [vmem:[%s2 + $0x10] sm:$0xf]
    %v24 = vld [vmem:[%s2 + $0x14] sm:$0xf]
    %v25 = vld [vmem:[%s2 + $0x18] sm:$0xf]
    %v26 = vld [vmem:[%s2 + $0x1c] sm:$0xf]
    %v27 = vld [vmem:[%s2 + $0x20] sm:$0xf]
    %v28 = vld [vmem:[%s2 + $0x24] sm:$0xf]
    %v29 = vld [vmem:[%s2 + $0x28] sm:$0xf]
    %v30 = vld [vmem:[%s2 + $0x2c] sm:$0xf]
    %v31 = vld [vmem:[%s2 + $0x30] sm:$0xf]
    %v32 = vld [vmem:[%s2 + $0x34] sm:$0xf]
    %v33 = vld [vmem:[%s2 + $0x38] sm:$0xf]
    %v34 = vld [vmem:[%s2 + $0x3c] sm:$0xf]
    %v35 = vld [vmem:[%s2 + $0x40] sm:$0xf]
    %v36 = vld [vmem:[%s2 + $0x44] sm:$0xf]
    %v37 = vld [vmem:[%s2 + $0x48] sm:$0xf]
    %v38 = vld [vmem:[%s2 + $0x4c] sm:$0xf]
    %v39 = vld [vmem:[%s2 + $0x50] sm:$0xf]
    %v40 = vld [vmem:[%s2 + $0x54] sm:$0xf]
    %v41 = vld [vmem:[%s2 + $0x58] sm:$0xf]
    %v42 = vld [vmem:[%s2 + $0x5c] sm:$0xf]
    %v43 = vld [vmem:[%s2 + $0x60] sm:$0xf]
    %v44 = vld [vmem:[%s2 + $0x64] sm:$0xf]
    %v45 = vld [vmem:[%s2 + $0x68] sm:$0xf]
    %v46 = vld [vmem:[%s2 + $0x6c] sm:$0xf]
    %v47 = vld [vmem:[%s2 + $0x70] sm:$0xf]
    %v48 = vld [vmem:[%s2 + $0x74] sm:$0xf]
    %v49 = vld [vmem:[%s2 + $0x78] sm:$0xf]
    %v50 = vld [vmem:[%s2 + $0x7c] sm:$0xf]
    %v51 = vld [vmem:[%s2 + $0x80] sm:$0xf]
    %v52 = vld [vmem:[%s2 + $0x84] sm:$0xf]
    %v53 = vld [vmem:[%s2 + $0x88] sm:$0xf]
    %v54 = vld [vmem:[%s2 + $0x8c] sm:$0xf]
    %v55 = vld [vmem:[%s2 + $0x90] sm:$0xf]
    %v56 = vld [vmem:[%s2 + $0x94] sm:$0xf]
    %v57 = vld [vmem:[%s2 + $0x98] sm:$0xf]
    %v58 = vld [vmem:[%s2 + $0x9c] sm:$0xf]
    %v59 = vld [vmem:[%s2 + $0xa0] sm:$0xf]
    %v60 = vld [vmem:[%s2 + $0xa4] sm:$0xf]
    %v61 = vld [vmem:[%s2 + $0xa8] sm:$0xf]
    %v62 = vld [vmem:[%s2 + $0xac] sm:$0xf]
    %v63 = vld [vmem:[%s2 + $0xb0] sm:$0xf]
    %v64 = vld [vmem:[%s2 + $0xb4] sm:$0xf]
    %v65 = vld [vmem:[%s2 + $0xb8] sm:$0xf]
    %v66 = vld [vmem:[%s2 + $0xbc] sm:$0xf]
    %v67 = vld [vmem:[%s2 + $0xc0] sm:$0xf]
    %v68 = vld [vmem:[%s2 + $0xc4] sm:$0xf]
    %v69 = vld [vmem:[%s2 + $0xc8] sm:$0xf]
    %v70 = vld [vmem:[%s2 + $0xcc] sm:$0xf]
    %v71 = vld [vmem:[%s2 + $0xd0] sm:$0xf]
    %v72 = vld [vmem:[%s2 + $0xd4] sm:$0xf]
    %v73 = vld [vmem:[%s2 + $0xd8] sm:$0xf]
    %v74 = vld [vmem:[%s2 + $0xdc] sm:$0xf]
    %v75 = vld [vmem:[%s2 + $0xe0] sm:$0xf]
    %v76 = vld [vmem:[%s2 + $0xe4] sm:$0xf]
    %v77 = vld [vmem:[%s2 + $0xe8] sm:$0xf]
    %v78 = vld [vmem:[%s2 + $0xec] sm:$0xf]
    %v79 = vld [vmem:[%s2 + $0xf0] sm:$0xf]
    %v80 = vld [vmem:[%s2 + $0xf4] sm:$0xf]
    %v81 = vld [vmem:[%s2 + $0xf8] sm:$0xf]
    %v82 = vld [vmem:[%s2 + $0xfc] sm:$0xf]
    %v83 = vld [vmem:[%s2 + $0x100] sm:$0xf]
    %v84 = vld [vmem:[%s2 + $0x104] sm:$0xf]
    %v85 = vld [vmem:[%s2 + $0x108] sm:$0xf]
    %v86 = vld [vmem:[%s2 + $0x10c] sm:$0xf]
    %v87 = vld [vmem:[%s2 + $0x110] sm:$0xf]
    %v88 = vld [vmem:[%s2 + $0x114] sm:$0xf]
    %v89 = vld [vmem:[%s2 + $0x118] sm:$0xf]
    %v90 = vld [vmem:[%s2 + $0x11c] sm:$0xf]
    %v91 = vld [vmem:[%s2 + $0x120] sm:$0xf]
    %v92 = vld [vmem:[%s2 + $0x124] sm:$0xf]
    %v93 = vld [vmem:[%s2 + $0x128] sm:$0xf]
    %v94 = vld [vmem:[%s2 + $0x12c] sm:$0xf]
    %v95 = vld [vmem:[%s2 + $0x130] sm:$0xf]
    %v96 = vld [vmem:[%s2 + $0x134] sm:$0xf]
    %v97 = vld [vmem:[%s2 + $0x138] sm:$0xf]
    %v98 = vld [vmem:[%s2 + $0x13c] sm:$0xf]
    %v99 = vld [vmem:[%s2 + $0x140] sm:$0xf]
    %v100 = vld [vmem:[%s2 + $0x144] sm:$0xf]
    %v101 = vld [vmem:[%s2 + $0x148] sm:$0xf]
    %v102 = vld [vmem:[%s2 + $0x14c] sm:$0xf]
    %v103 = vld [vmem:[%s2 + $0x150] sm:$0xf]
    %v104 = vld [vmem:[%s2 + $0x154] sm:$0xf]
    %v105 = vld [vmem:[%s2 + $0x158] sm:$0xf]
    %v106 = vld [vmem:[%s2 + $0x15c] sm:$0xf]
    %v107 = vld [vmem:[%s2 + $0x160] sm:$0xf]
    %v108 = vld [vmem:[%s2 + $0x164] sm:$0xf]
    %v109 = vld [vmem:[%s2 + $0x168] sm:$0xf]
    %v110 = vld [vmem:[%s2 + $0x16c] sm:$0xf]
    %v111 = vld [vmem:[%s2 + $0x170] sm:$0xf]
    %v112 = vld [vmem:[%s2 + $0x174] sm:$0xf]
    %v113 = vld [vmem:[%s2 + $0x178] sm:$0xf]
    %v114 = vld [vmem:[%s2 + $0x17c] sm:$0xf]
    %v115 = vld [vmem:[%s2 + $0x180] sm:$0xf]
    %v116 = vld [vmem:[%s2 + $0x184] sm:$0xf]
    %v117 = vld [vmem:[%s2 + $0x188] sm:$0xf]
    %v118 = vld [vmem:[%s2 + $0x18c] sm:$0xf]
    %v119 = vld [vmem:[%s2 + $0x190] sm:$0xf]
    %v120 = vld [vmem:[%s2 + $0x194] sm:$0xf]
    %v121 = vld [vmem:[%s2 + $0x198] sm:$0xf]
    %v122 = vld [vmem:[%s2 + $0x19c] sm:$0xf]
    %v123 = vld [vmem:[%s2 + $0x1a0] sm:$0xf]
    %v124 = vld [vmem:[%s2 + $0x1a4] sm:$0xf]
    %v125 = vld [vmem:[%s2 + $0x1a8] sm:$0xf]
    %v126 = vld [vmem:[%s2 + $0x1ac] sm:$0xf]
    %v127 = vld [vmem:[%s2 + $0x1b0] sm:$0xf]
    %v128 = vld [vmem:[%s2 + $0x1b4] sm:$0xf]
    %v129 = vld [vmem:[%s2 + $0x1b8] sm:$0xf]
    %v130 = vld [vmem:[%s2 + $0x1bc] sm:$0xf]
    %v131 = vld [vmem:[%s2 + $0x1c0] sm:$0xf]
    %v132 = vld [vmem:[%s2 + $0x1c4] sm:$0xf]
    %v133 = vld [vmem:[%s2 + $0x1c8] sm:$0xf]
    %v134 = vld [vmem:[%s2 + $0x1cc] sm:$0xf]
    %v135 = vld [vmem:[%s2 + $0x1d0] sm:$0xf]
    %v136 = vld [vmem:[%s2 + $0x1d4] sm:$0xf]
    %v137 = vld [vmem:[%s2 + $0x1d8] sm:$0xf]
    %v138 = vld [vmem:[%s2 + $0x1dc] sm:$0xf]
    %v139 = vld [vmem:[%s2 + $0x1e0] sm:$0xf]
    %v140 = vld [vmem:[%s2 + $0x1e4] sm:$0xf]
    %v141 = vld [vmem:[%s2 + $0x1e8] sm:$0xf]
    %v142 = vld [vmem:[%s2 + $0x1ec] sm:$0xf]
    %v143 = vld [vmem:[%s2 + $0x1f0] sm:$0xf]
    %v144 = vld [vmem:[%s2 + $0x1f4] sm:$0xf]
    %v145 = vld [vmem:[%s2 + $0x1f8] sm:$0xf]
    %v146 = vld [vmem:[%s2 + $0x1fc] sm:$0xf]
    %v147 = vld [vmem:[%s3] sm:$0x1]
    %v148 = vld [vmem:[%s1] sm:$0xff]
    %v149 = vld [vmem:[%s1 + $0x8] sm:$0xff]
    %v150 = vld [vmem:[%s0] sm:$0xff]
    %v151 = vld [vmem:[%s0 + $0x8] sm:$0xff]
    %v154 = vcombine.high %v150, %v150
    %v156 = vunpack.c.l.s4 1983009808
    %v157 = vunpack.c.0.s8 %v156
    %v158 = vlaneseq
    %v159 = vshrl.u32 %v158, 7
    %v160 = vsub.s32 %v157, %v159
    %v161 = vrot.slane %v150, %v160
    %v163 = vunpack.c.l.s4 1983009808
    %v164 = vunpack.c.0.s8 %v163
    %v165 = vlaneseq
    %v166 = vshrl.u32 %v165, 7
    %v167 = vsub.s32 %v164, %v166
    %v168 = vrot.slane %v154, %v167
    %v169 = vcombine.high %v161, %v161
    %v170 = vcombine.high %v168, %v168
    %v171 = vcombine.high %v151, %v151
    %v173 = vunpack.c.l.s4 1983009808
    %v174 = vunpack.c.0.s8 %v173
    %v175 = vlaneseq
    %v176 = vshrl.u32 %v175, 7
    %v177 = vsub.s32 %v174, %v176
    %v178 = vrot.slane %v151, %v177
    %v180 = vunpack.c.l.s4 1983009808
    %v181 = vunpack.c.0.s8 %v180
    %v182 = vlaneseq
    %v183 = vshrl.u32 %v182, 7
    %v184 = vsub.s32 %v181, %v183
    %v185 = vrot.slane %v171, %v184
    %v186 = vcombine.high %v178, %v178
    %v187 = vcombine.high %v185, %v185
    %v196 = vpack.c.bf16 %v161, %v161
    %v197 = vpack.c.bf16 %v169, %v169
    %v198 = vpack.c.bf16 %v168, %v168
    %v199 = vpack.c.bf16 %v170, %v170
    %v200 = vpack.c.bf16 %v178, %v178
    %v201 = vpack.c.bf16 %v186, %v186
    %v202 = vpack.c.bf16 %v185, %v185
    %v203 = vpack.c.bf16 %v187, %v187
    %v205 = vlaneseq
    %v206 = vshrl.u32 %v205, 7
    %v207 = vsub.s32 0, %v206
    %v208 = vrot.slane %v147, %v207
    %v338 = vunpack.c.l.b16 %v19
    %v339 = vunpack.c.l.b16 %v20
    %v340 = vunpack.c.l.b16 %v21
    %v341 = vunpack.c.l.b16 %v22
    %v342 = vunpack.c.l.b16 %v23
    %v343 = vunpack.c.l.b16 %v24
    %v344 = vunpack.c.l.b16 %v25
    %v345 = vunpack.c.l.b16 %v26
    %v346 = vunpack.c.l.b16 %v27
    %v347 = vunpack.c.l.b16 %v28
    %v348 = vunpack.c.l.b16 %v29
    %v349 = vunpack.c.l.b16 %v30
    %v350 = vunpack.c.l.b16 %v31
    %v351 = vunpack.c.l.b16 %v32
    %v352 = vunpack.c.l.b16 %v33
    %v353 = vunpack.c.l.b16 %v34
    %v354 = vunpack.c.l.b16 %v35
    %v355 = vunpack.c.l.b16 %v36
    %v356 = vunpack.c.l.b16 %v37
    %v357 = vunpack.c.l.b16 %v38
    %v358 = vunpack.c.l.b16 %v39
    %v359 = vunpack.c.l.b16 %v40
    %v360 = vunpack.c.l.b16 %v41
    %v361 = vunpack.c.l.b16 %v42
    %v362 = vunpack.c.l.b16 %v43
    %v363 = vunpack.c.l.b16 %v44
    %v364 = vunpack.c.l.b16 %v45
    %v365 = vunpack.c.l.b16 %v46
    %v366 = vunpack.c.l.b16 %v47
    %v367 = vunpack.c.l.b16 %v48
    %v368 = vunpack.c.l.b16 %v49
    %v369 = vunpack.c.l.b16 %v50
    %v370 = vunpack.c.l.b16 %v51
    %v371 = vunpack.c.l.b16 %v52
    %v372 = vunpack.c.l.b16 %v53
    %v373 = vunpack.c.l.b16 %v54
    %v374 = vunpack.c.l.b16 %v55
    %v375 = vunpack.c.l.b16 %v56
    %v376 = vunpack.c.l.b16 %v57
    %v377 = vunpack.c.l.b16 %v58
    %v378 = vunpack.c.l.b16 %v59
    %v379 = vunpack.c.l.b16 %v60
    %v380 = vunpack.c.l.b16 %v61
    %v381 = vunpack.c.l.b16 %v62
    %v382 = vunpack.c.l.b16 %v63
    %v383 = vunpack.c.l.b16 %v64
    %v384 = vunpack.c.l.b16 %v65
    %v385 = vunpack.c.l.b16 %v66
    %v386 = vunpack.c.l.b16 %v67
    %v387 = vunpack.c.l.b16 %v68
    %v388 = vunpack.c.l.b16 %v69
    %v389 = vunpack.c.l.b16 %v70
    %v390 = vunpack.c.l.b16 %v71
    %v391 = vunpack.c.l.b16 %v72
    %v392 = vunpack.c.l.b16 %v73
    %v393 = vunpack.c.l.b16 %v74
    %v394 = vunpack.c.l.b16 %v75
    %v395 = vunpack.c.l.b16 %v76
    %v396 = vunpack.c.l.b16 %v77
    %v397 = vunpack.c.l.b16 %v78
    %v398 = vunpack.c.l.b16 %v79
    %v399 = vunpack.c.l.b16 %v80
    %v400 = vunpack.c.l.b16 %v81
    %v401 = vunpack.c.l.b16 %v82
    %v402 = vunpack.c.l.b16 %v83
    %v403 = vunpack.c.l.b16 %v84
    %v404 = vunpack.c.l.b16 %v85
    %v405 = vunpack.c.l.b16 %v86
    %v406 = vunpack.c.l.b16 %v87
    %v407 = vunpack.c.l.b16 %v88
    %v408 = vunpack.c.l.b16 %v89
    %v409 = vunpack.c.l.b16 %v90
    %v410 = vunpack.c.l.b16 %v91
    %v411 = vunpack.c.l.b16 %v92
    %v412 = vunpack.c.l.b16 %v93
    %v413 = vunpack.c.l.b16 %v94
    %v414 = vunpack.c.l.b16 %v95
    %v415 = vunpack.c.l.b16 %v96
    %v416 = vunpack.c.l.b16 %v97
    %v417 = vunpack.c.l.b16 %v98
    %v418 = vunpack.c.l.b16 %v99
    %v419 = vunpack.c.l.b16 %v100
    %v420 = vunpack.c.l.b16 %v101
    %v421 = vunpack.c.l.b16 %v102
    %v422 = vunpack.c.l.b16 %v103
    %v423 = vunpack.c.l.b16 %v104
    %v424 = vunpack.c.l.b16 %v105
    %v425 = vunpack.c.l.b16 %v106
    %v426 = vunpack.c.l.b16 %v107
    %v427 = vunpack.c.l.b16 %v108
    %v428 = vunpack.c.l.b16 %v109
    %v429 = vunpack.c.l.b16 %v110
    %v430 = vunpack.c.l.b16 %v111
    %v431 = vunpack.c.l.b16 %v112
    %v432 = vunpack.c.l.b16 %v113
    %v433 = vunpack.c.l.b16 %v114
    %v434 = vunpack.c.l.b16 %v115
    %v435 = vunpack.c.l.b16 %v116
    %v436 = vunpack.c.l.b16 %v117
    %v437 = vunpack.c.l.b16 %v118
    %v438 = vunpack.c.l.b16 %v119
    %v439 = vunpack.c.l.b16 %v120
    %v440 = vunpack.c.l.b16 %v121
    %v441 = vunpack.c.l.b16 %v122
    %v442 = vunpack.c.l.b16 %v123
    %v443 = vunpack.c.l.b16 %v124
    %v444 = vunpack.c.l.b16 %v125
    %v445 = vunpack.c.l.b16 %v126
    %v446 = vunpack.c.l.b16 %v127
    %v447 = vunpack.c.l.b16 %v128
    %v448 = vunpack.c.l.b16 %v129
    %v449 = vunpack.c.l.b16 %v130
    %v450 = vunpack.c.l.b16 %v131
    %v451 = vunpack.c.l.b16 %v132
    %v452 = vunpack.c.l.b16 %v133
    %v453 = vunpack.c.l.b16 %v134
    %v454 = vunpack.c.l.b16 %v135
    %v455 = vunpack.c.l.b16 %v136
    %v456 = vunpack.c.l.b16 %v137
    %v457 = vunpack.c.l.b16 %v138
    %v458 = vunpack.c.l.b16 %v139
    %v459 = vunpack.c.l.b16 %v140
    %v460 = vunpack.c.l.b16 %v141
    %v461 = vunpack.c.l.b16 %v142
    %v462 = vunpack.c.l.b16 %v143
    %v463 = vunpack.c.l.b16 %v144
    %v464 = vunpack.c.l.b16 %v145
    %v465 = vunpack.c.l.b16 %v146
    %v466 = vpack.c.b16 %v339, %v338
    %v467 = vpack.c.b16 %v341, %v340
    %v468 = vpack.c.b16 %v343, %v342
    %v469 = vpack.c.b16 %v345, %v344
    %v470 = vpack.c.b16 %v347, %v346
    %v471 = vpack.c.b16 %v349, %v348
    %v472 = vpack.c.b16 %v351, %v350
    %v473 = vpack.c.b16 %v353, %v352
    %v474 = vpack.c.b16 %v355, %v354
    %v475 = vpack.c.b16 %v357, %v356
    %v476 = vpack.c.b16 %v359, %v358
    %v477 = vpack.c.b16 %v361, %v360
    %v478 = vpack.c.b16 %v363, %v362
    %v479 = vpack.c.b16 %v365, %v364
    %v480 = vpack.c.b16 %v367, %v366
    %v481 = vpack.c.b16 %v369, %v368
    %v482 = vpack.c.b16 %v371, %v370
    %v483 = vpack.c.b16 %v373, %v372
    %v484 = vpack.c.b16 %v375, %v374
    %v485 = vpack.c.b16 %v377, %v376
    %v486 = vpack.c.b16 %v379, %v378
    %v487 = vpack.c.b16 %v381, %v380
    %v488 = vpack.c.b16 %v383, %v382
    %v489 = vpack.c.b16 %v385, %v384
    %v490 = vpack.c.b16 %v387, %v386
    %v491 = vpack.c.b16 %v389, %v388
    %v492 = vpack.c.b16 %v391, %v390
    %v493 = vpack.c.b16 %v393, %v392
    %v494 = vpack.c.b16 %v395, %v394
    %v495 = vpack.c.b16 %v397, %v396
    %v496 = vpack.c.b16 %v399, %v398
    %v497 = vpack.c.b16 %v401, %v400
    %v498 = vpack.c.b16 %v403, %v402
    %v499 = vpack.c.b16 %v405, %v404
    %v500 = vpack.c.b16 %v407, %v406
    %v501 = vpack.c.b16 %v409, %v408
    %v502 = vpack.c.b16 %v411, %v410
    %v503 = vpack.c.b16 %v413, %v412
    %v504 = vpack.c.b16 %v415, %v414
    %v505 = vpack.c.b16 %v417, %v416
    %v506 = vpack.c.b16 %v419, %v418
    %v507 = vpack.c.b16 %v421, %v420
    %v508 = vpack.c.b16 %v423, %v422
    %v509 = vpack.c.b16 %v425, %v424
    %v510 = vpack.c.b16 %v427, %v426
    %v511 = vpack.c.b16 %v429, %v428
    %v512 = vpack.c.b16 %v431, %v430
    %v513 = vpack.c.b16 %v433, %v432
    %v514 = vpack.c.b16 %v435, %v434
    %v515 = vpack.c.b16 %v437, %v436
    %v516 = vpack.c.b16 %v439, %v438
    %v517 = vpack.c.b16 %v441, %v440
    %v518 = vpack.c.b16 %v443, %v442
    %v519 = vpack.c.b16 %v445, %v444
    %v520 = vpack.c.b16 %v447, %v446
    %v521 = vpack.c.b16 %v449, %v448
    %v522 = vpack.c.b16 %v451, %v450
    %v523 = vpack.c.b16 %v453, %v452
    %v524 = vpack.c.b16 %v455, %v454
    %v525 = vpack.c.b16 %v457, %v456
    %v526 = vpack.c.b16 %v459, %v458
    %v527 = vpack.c.b16 %v461, %v460
    %v528 = vpack.c.b16 %v463, %v462
    %v529 = vpack.c.b16 %v465, %v464
    %594 = vmatprep.subr.bf16.mxu0 0
    %595 = vmatpush1.bf16.msra.mxu0 %v466
    %596 = vmatprep.subr.bf16.mxu0 0
    %597 = vmatpush1.bf16.msra.mxu0 %v467
    %598 = vmatprep.subr.bf16.mxu0 0
    %599 = vmatpush1.bf16.msra.mxu0 %v468
    %600 = vmatprep.subr.bf16.mxu0 0
    %601 = vmatpush1.bf16.msra.mxu0 %v469
    %602 = vmatprep.subr.bf16.mxu0 0
    %603 = vmatpush1.bf16.msra.mxu0 %v470
    %604 = vmatprep.subr.bf16.mxu0 0
    %605 = vmatpush1.bf16.msra.mxu0 %v471
    %606 = vmatprep.subr.bf16.mxu0 0
    %607 = vmatpush1.bf16.msra.mxu0 %v472
    %608 = vmatprep.subr.bf16.mxu0 0
    %609 = vmatpush1.bf16.msra.mxu0 %v473
    %610 = vmatprep.subr.bf16.mxu0 0
    %611 = vmatpush1.bf16.msra.mxu0 %v474
    %612 = vmatprep.subr.bf16.mxu0 0
    %613 = vmatpush1.bf16.msra.mxu0 %v475
    %614 = vmatprep.subr.bf16.mxu0 0
    %615 = vmatpush1.bf16.msra.mxu0 %v476
    %616 = vmatprep.subr.bf16.mxu0 0
    %617 = vmatpush1.bf16.msra.mxu0 %v477
    %618 = vmatprep.subr.bf16.mxu0 0
    %619 = vmatpush1.bf16.msra.mxu0 %v478
    %620 = vmatprep.subr.bf16.mxu0 0
    %621 = vmatpush1.bf16.msra.mxu0 %v479
    %622 = vmatprep.subr.bf16.mxu0 0
    %623 = vmatpush1.bf16.msra.mxu0 %v480
    %624 = vmatprep.subr.bf16.mxu0 0
    %625 = vmatpush1.bf16.msra.mxu0 %v481
    %626 = vmatprep.mubr.bf16.mxu0 %v197
    %627 = vmatmul.mubr.bf16.gmra.mrb[0].mxu0 %v196
    %v628 = vpop.f32.mrb[0].mxu0
    %v629 = vadd.f32 %v208, %v628
    %v630 = vpop.f32.mrb[0].mxu0
    %v631 = vpop.f32.mrb[0].mxu0
    %v632 = vpop.f32.mrb[0].mxu0
    %633 = vdwg.mxu0
    %634 = vmatprep.subr.bf16.mxu0 0
    %635 = vmatpush1.bf16.msra.mxu0 %v482
    %636 = vmatprep.subr.bf16.mxu0 0
    %637 = vmatpush1.bf16.msra.mxu0 %v483
    %638 = vmatprep.subr.bf16.mxu0 0
    %639 = vmatpush1.bf16.msra.mxu0 %v484
    %640 = vmatprep.subr.bf16.mxu0 0
    %641 = vmatpush1.bf16.msra.mxu0 %v485
    %642 = vmatprep.subr.bf16.mxu0 0
    %643 = vmatpush1.bf16.msra.mxu0 %v486
    %644 = vmatprep.subr.bf16.mxu0 0
    %645 = vmatpush1.bf16.msra.mxu0 %v487
    %646 = vmatprep.subr.bf16.mxu0 0
    %647 = vmatpush1.bf16.msra.mxu0 %v488
    %648 = vmatprep.subr.bf16.mxu0 0
    %649 = vmatpush1.bf16.msra.mxu0 %v489
    %650 = vmatprep.subr.bf16.mxu0 0
    %651 = vmatpush1.bf16.msra.mxu0 %v490
    %652 = vmatprep.subr.bf16.mxu0 0
    %653 = vmatpush1.bf16.msra.mxu0 %v491
    %654 = vmatprep.subr.bf16.mxu0 0
    %655 = vmatpush1.bf16.msra.mxu0 %v492
    %656 = vmatprep.subr.bf16.mxu0 0
    %657 = vmatpush1.bf16.msra.mxu0 %v493
    %658 = vmatprep.subr.bf16.mxu0 0
    %659 = vmatpush1.bf16.msra.mxu0 %v494
    %660 = vmatprep.subr.bf16.mxu0 0
    %661 = vmatpush1.bf16.msra.mxu0 %v495
    %662 = vmatprep.subr.bf16.mxu0 0
    %663 = vmatpush1.bf16.msra.mxu0 %v496
    %664 = vmatprep.subr.bf16.mxu0 0
    %665 = vmatpush1.bf16.msra.mxu0 %v497
    %666 = vmatprep.mubr.bf16.mxu0 %v199
    %667 = vmatmul.mubr.bf16.gmra.mrb[0].mxu0 %v198
    %v668 = vpop.f32.mrb[0].mxu0
    %v669 = vadd.f32 %v629, %v668
    %v670 = vpop.f32.mrb[0].mxu0
    %v671 = vpop.f32.mrb[0].mxu0
    %v672 = vpop.f32.mrb[0].mxu0
    %673 = vdwg.mxu0
    %674 = vmatprep.subr.bf16.mxu0 0
    %675 = vmatpush1.bf16.msra.mxu0 %v498
    %676 = vmatprep.subr.bf16.mxu0 0
    %677 = vmatpush1.bf16.msra.mxu0 %v499
    %678 = vmatprep.subr.bf16.mxu0 0
    %679 = vmatpush1.bf16.msra.mxu0 %v500
    %680 = vmatprep.subr.bf16.mxu0 0
    %681 = vmatpush1.bf16.msra.mxu0 %v501
    %682 = vmatprep.subr.bf16.mxu0 0
    %683 = vmatpush1.bf16.msra.mxu0 %v502
    %684 = vmatprep.subr.bf16.mxu0 0
    %685 = vmatpush1.bf16.msra.mxu0 %v503
    %686 = vmatprep.subr.bf16.mxu0 0
    %687 = vmatpush1.bf16.msra.mxu0 %v504
    %688 = vmatprep.subr.bf16.mxu0 0
    %689 = vmatpush1.bf16.msra.mxu0 %v505
    %690 = vmatprep.subr.bf16.mxu0 0
    %691 = vmatpush1.bf16.msra.mxu0 %v506
    %692 = vmatprep.subr.bf16.mxu0 0
    %693 = vmatpush1.bf16.msra.mxu0 %v507
    %694 = vmatprep.subr.bf16.mxu0 0
    %695 = vmatpush1.bf16.msra.mxu0 %v508
    %696 = vmatprep.subr.bf16.mxu0 0
    %697 = vmatpush1.bf16.msra.mxu0 %v509
    %698 = vmatprep.subr.bf16.mxu0 0
    %699 = vmatpush1.bf16.msra.mxu0 %v510
    %700 = vmatprep.subr.bf16.mxu0 0
    %701 = vmatpush1.bf16.msra.mxu0 %v511
    %702 = vmatprep.subr.bf16.mxu0 0
    %703 = vmatpush1.bf16.msra.mxu0 %v512
    %704 = vmatprep.subr.bf16.mxu0 0
    %705 = vmatpush1.bf16.msra.mxu0 %v513
    %706 = vmatprep.mubr.bf16.mxu0 %v201
    %707 = vmatmul.mubr.bf16.gmra.mrb[0].mxu0 %v200
    %v708 = vpop.f32.mrb[0].mxu0
    %v709 = vadd.f32 %v669, %v708
    %v710 = vpop.f32.mrb[0].mxu0
    %v711 = vpop.f32.mrb[0].mxu0
    %v712 = vpop.f32.mrb[0].mxu0
    %713 = vdwg.mxu0
    %714 = vmatprep.subr.bf16.mxu0 0
    %715 = vmatpush1.bf16.msra.mxu0 %v514
    %716 = vmatprep.subr.bf16.mxu0 0
    %717 = vmatpush1.bf16.msra.mxu0 %v515
    %718 = vmatprep.subr.bf16.mxu0 0
    %719 = vmatpush1.bf16.msra.mxu0 %v516
    %720 = vmatprep.subr.bf16.mxu0 0
    %721 = vmatpush1.bf16.msra.mxu0 %v517
    %722 = vmatprep.subr.bf16.mxu0 0
    %723 = vmatpush1.bf16.msra.mxu0 %v518
    %724 = vmatprep.subr.bf16.mxu0 0
    %725 = vmatpush1.bf16.msra.mxu0 %v519
    %726 = vmatprep.subr.bf16.mxu0 0
    %727 = vmatpush1.bf16.msra.mxu0 %v520
    %728 = vmatprep.subr.bf16.mxu0 0
    %729 = vmatpush1.bf16.msra.mxu0 %v521
    %730 = vmatprep.subr.bf16.mxu0 0
    %731 = vmatpush1.bf16.msra.mxu0 %v522
    %732 = vmatprep.subr.bf16.mxu0 0
    %733 = vmatpush1.bf16.msra.mxu0 %v523
    %734 = vmatprep.subr.bf16.mxu0 0
    %735 = vmatpush1.bf16.msra.mxu0 %v524
    %736 = vmatprep.subr.bf16.mxu0 0
    %737 = vmatpush1.bf16.msra.mxu0 %v525
    %738 = vmatprep.subr.bf16.mxu0 0
    %739 = vmatpush1.bf16.msra.mxu0 %v526
    %740 = vmatprep.subr.bf16.mxu0 0
    %741 = vmatpush1.bf16.msra.mxu0 %v527
    %742 = vmatprep.subr.bf16.mxu0 0
    %743 = vmatpush1.bf16.msra.mxu0 %v528
    %744 = vmatprep.subr.bf16.mxu0 0
    %745 = vmatpush1.bf16.msra.mxu0 %v529
    %746 = vmatprep.mubr.bf16.mxu0 %v203
    %747 = vmatmul.mubr.bf16.gmra.mrb[0].mxu0 %v202
    %v748 = vpop.f32.mrb[0].mxu0
    %v749 = vadd.f32 %v709, %v748
    %v750 = vpop.f32.mrb[0].mxu0
    %v751 = vpop.f32.mrb[0].mxu0
    %v752 = vpop.f32.mrb[0].mxu0
    %753 = vdwg.mxu0
    %vm754 = vcmask 74752
    %v755 = vsel %vm754, %v749, -inf
    %756 = vmax.xlane.f32.xlu0 %v755
    %v757 = vpop.xlane.xlu0 %756
    %v758 = vsub.f32 %v749, %v757
    %v759 = vmul.f32 %v758, 1.442695
    %v760 = vpow.pop %v759
    %v761 = vsel %vm754, %v760, 0.0
    %762 = vadd.xlane.f32.xlu0 %v761
    %v763 = vpop.xlane.xlu0 %762
    %v764 = vlog2.pop %v763
    %v765 = vmul.f32 %v764, 0.6931472
    %v766 = vsub.f32 %v758, %v765
    %v767 = vmul.f32 %v766, 1.442695
    %v768 = vpow.pop %v767
    %v769 = vmul.f32 %v148, %v148
    %v771 = vrot.slane %v148, 4
    %v773 = vmul.f32 %v771, %v771
    %v774 = vadd.f32 %v769, %v773
    %v775 = vmul.f32 %v149, %v149
    %v776 = vadd.f32 %v774, %v775
    %v778 = vrot.slane %v149, 4
    %v780 = vmul.f32 %v778, %v778
    %v781 = vadd.f32 %v776, %v780
    %v782 = vrsqrt.pop %v781
    %v783 = vmul.f32 %v781, %v782
    %vm784 = vcmp.eq.f32.partialorder %v781, inf
    %v785 = vsel %vm784, %v781, %v783
    %vm786 = vcmp.eq.f32.partialorder %v781, 0.0
    %v787 = vand.u32 %v781, 2147483648
    %v788 = vsel %vm786, %v787, %v785
    %v789 = vmax.f32 %v788, 1e-12
    %v790 = vrcp.pop %v789
    %v793 = vunpack.c.l.s4 1983009808
    %v794 = vunpack.c.0.s8 %v793
    %v795 = vlaneseq
    %v796 = vshrl.u32 %v795, 7
    %v797 = vsub.s32 %v794, %v796
    %v798 = vrot.slane %v790, %v797
    %v799 = vcombine.high %v798, %v798
    %v800 = vcombine.low %v798, %v799
    %v802 = vunpack.c.l.s4 1983009808
    %v803 = vunpack.c.0.s8 %v802
    %v804 = vlaneseq
    %v805 = vshrl.u32 %v804, 7
    %v806 = vsub.s32 %v803, %v805
    %v807 = vrot.slane %v800, %v806
    %v808 = vcombine.low %v807, %v807
    %v810 = vmul.f32 %v148, %v808
    %v811 = vmul.f32 %v149, %v808
    %v814 = vcombine.high %v810, %v810
    %v816 = vunpack.c.l.s4 1983009808
    %v817 = vunpack.c.0.s8 %v816
    %v818 = vlaneseq
    %v819 = vshrl.u32 %v818, 7
    %v820 = vsub.s32 %v817, %v819
    %v821 = vrot.slane %v810, %v820
    %v823 = vunpack.c.l.s4 1983009808
    %v824 = vunpack.c.0.s8 %v823
    %v825 = vlaneseq
    %v826 = vshrl.u32 %v825, 7
    %v827 = vsub.s32 %v824, %v826
    %v828 = vrot.slane %v814, %v827
    %v829 = vcombine.high %v821, %v821
    %v830 = vcombine.high %v828, %v828
    %v831 = vcombine.high %v811, %v811
    %v833 = vunpack.c.l.s4 1983009808
    %v834 = vunpack.c.0.s8 %v833
    %v835 = vlaneseq
    %v836 = vshrl.u32 %v835, 7
    %v837 = vsub.s32 %v834, %v836
    %v838 = vrot.slane %v811, %v837
    %v840 = vunpack.c.l.s4 1983009808
    %v841 = vunpack.c.0.s8 %v840
    %v842 = vlaneseq
    %v843 = vshrl.u32 %v842, 7
    %v844 = vsub.s32 %v841, %v843
    %v845 = vrot.slane %v831, %v844
    %v846 = vcombine.high %v838, %v838
    %v847 = vcombine.high %v845, %v845
    %v856 = vpack.c.bf16 %v821, %v821
    %v857 = vpack.c.bf16 %v829, %v829
    %v858 = vpack.c.bf16 %v828, %v828
    %v859 = vpack.c.bf16 %v830, %v830
    %v860 = vpack.c.bf16 %v838, %v838
    %v861 = vpack.c.bf16 %v846, %v846
    %v862 = vpack.c.bf16 %v845, %v845
    %v863 = vpack.c.bf16 %v847, %v847
    %864 = vmatprep.subr.bf16.mxu0 0
    %865 = vmatpush1.bf16.msra.mxu0 %v466
    %866 = vmatprep.subr.bf16.mxu0 0
    %867 = vmatpush1.bf16.msra.mxu0 %v467
    %868 = vmatprep.subr.bf16.mxu0 0
    %869 = vmatpush1.bf16.msra.mxu0 %v468
    %870 = vmatprep.subr.bf16.mxu0 0
    %871 = vmatpush1.bf16.msra.mxu0 %v469
    %872 = vmatprep.subr.bf16.mxu0 0
    %873 = vmatpush1.bf16.msra.mxu0 %v470
    %874 = vmatprep.subr.bf16.mxu0 0
    %875 = vmatpush1.bf16.msra.mxu0 %v471
    %876 = vmatprep.subr.bf16.mxu0 0
    %877 = vmatpush1.bf16.msra.mxu0 %v472
    %878 = vmatprep.subr.bf16.mxu0 0
    %879 = vmatpush1.bf16.msra.mxu0 %v473
    %880 = vmatprep.subr.bf16.mxu0 0
    %881 = vmatpush1.bf16.msra.mxu0 %v474
    %882 = vmatprep.subr.bf16.mxu0 0
    %883 = vmatpush1.bf16.msra.mxu0 %v475
    %884 = vmatprep.subr.bf16.mxu0 0
    %885 = vmatpush1.bf16.msra.mxu0 %v476
    %886 = vmatprep.subr.bf16.mxu0 0
    %887 = vmatpush1.bf16.msra.mxu0 %v477
    %888 = vmatprep.subr.bf16.mxu0 0
    %889 = vmatpush1.bf16.msra.mxu0 %v478
    %890 = vmatprep.subr.bf16.mxu0 0
    %891 = vmatpush1.bf16.msra.mxu0 %v479
    %892 = vmatprep.subr.bf16.mxu0 0
    %893 = vmatpush1.bf16.msra.mxu0 %v480
    %894 = vmatprep.subr.bf16.mxu0 0
    %895 = vmatpush1.bf16.msra.mxu0 %v481
    %896 = vmatprep.mubr.bf16.mxu0 %v857
    %897 = vmatmul.mubr.bf16.gmra.mrb[0].mxu0 %v856
    %v898 = vpop.f32.mrb[0].mxu0
    %v899 = vadd.f32 0.0, %v898
    %v900 = vpop.f32.mrb[0].mxu0
    %v901 = vpop.f32.mrb[0].mxu0
    %v902 = vpop.f32.mrb[0].mxu0
    %903 = vdwg.mxu0
    %904 = vmatprep.subr.bf16.mxu0 0
    %905 = vmatpush1.bf16.msra.mxu0 %v482
    %906 = vmatprep.subr.bf16.mxu0 0
    %907 = vmatpush1.bf16.msra.mxu0 %v483
    %908 = vmatprep.subr.bf16.mxu0 0
    %909 = vmatpush1.bf16.msra.mxu0 %v484
    %910 = vmatprep.subr.bf16.mxu0 0
    %911 = vmatpush1.bf16.msra.mxu0 %v485
    %912 = vmatprep.subr.bf16.mxu0 0
    %913 = vmatpush1.bf16.msra.mxu0 %v486
    %914 = vmatprep.subr.bf16.mxu0 0
    %915 = vmatpush1.bf16.msra.mxu0 %v487
    %916 = vmatprep.subr.bf16.mxu0 0
    %917 = vmatpush1.bf16.msra.mxu0 %v488
    %918 = vmatprep.subr.bf16.mxu0 0
    %919 = vmatpush1.bf16.msra.mxu0 %v489
    %920 = vmatprep.subr.bf16.mxu0 0
    %921 = vmatpush1.bf16.msra.mxu0 %v490
    %922 = vmatprep.subr.bf16.mxu0 0
    %923 = vmatpush1.bf16.msra.mxu0 %v491
    %924 = vmatprep.subr.bf16.mxu0 0
    %925 = vmatpush1.bf16.msra.mxu0 %v492
    %926 = vmatprep.subr.bf16.mxu0 0
    %927 = vmatpush1.bf16.msra.mxu0 %v493
    %928 = vmatprep.subr.bf16.mxu0 0
    %929 = vmatpush1.bf16.msra.mxu0 %v494
    %930 = vmatprep.subr.bf16.mxu0 0
    %931 = vmatpush1.bf16.msra.mxu0 %v495
    %932 = vmatprep.subr.bf16.mxu0 0
    %933 = vmatpush1.bf16.msra.mxu0 %v496
    %934 = vmatprep.subr.bf16.mxu0 0
    %935 = vmatpush1.bf16.msra.mxu0 %v497
    %936 = vmatprep.mubr.bf16.mxu0 %v859
    %937 = vmatmul.mubr.bf16.gmra.mrb[0].mxu0 %v858
    %v938 = vpop.f32.mrb[0].mxu0
    %v939 = vadd.f32 %v899, %v938
    %v940 = vpop.f32.mrb[0].mxu0
    %v941 = vpop.f32.mrb[0].mxu0
    %v942 = vpop.f32.mrb[0].mxu0
    %943 = vdwg.mxu0
    %944 = vmatprep.subr.bf16.mxu0 0
    %945 = vmatpush1.bf16.msra.mxu0 %v498
    %946 = vmatprep.subr.bf16.mxu0 0
    %947 = vmatpush1.bf16.msra.mxu0 %v499
    %948 = vmatprep.subr.bf16.mxu0 0
    %949 = vmatpush1.bf16.msra.mxu0 %v500
    %950 = vmatprep.subr.bf16.mxu0 0
    %951 = vmatpush1.bf16.msra.mxu0 %v501
    %952 = vmatprep.subr.bf16.mxu0 0
    %953 = vmatpush1.bf16.msra.mxu0 %v502
    %954 = vmatprep.subr.bf16.mxu0 0
    %955 = vmatpush1.bf16.msra.mxu0 %v503
    %956 = vmatprep.subr.bf16.mxu0 0
    %957 = vmatpush1.bf16.msra.mxu0 %v504
    %958 = vmatprep.subr.bf16.mxu0 0
    %959 = vmatpush1.bf16.msra.mxu0 %v505
    %960 = vmatprep.subr.bf16.mxu0 0
    %961 = vmatpush1.bf16.msra.mxu0 %v506
    %962 = vmatprep.subr.bf16.mxu0 0
    %963 = vmatpush1.bf16.msra.mxu0 %v507
    %964 = vmatprep.subr.bf16.mxu0 0
    %965 = vmatpush1.bf16.msra.mxu0 %v508
    %966 = vmatprep.subr.bf16.mxu0 0
    %967 = vmatpush1.bf16.msra.mxu0 %v509
    %968 = vmatprep.subr.bf16.mxu0 0
    %969 = vmatpush1.bf16.msra.mxu0 %v510
    %970 = vmatprep.subr.bf16.mxu0 0
    %971 = vmatpush1.bf16.msra.mxu0 %v511
    %972 = vmatprep.subr.bf16.mxu0 0
    %973 = vmatpush1.bf16.msra.mxu0 %v512
    %974 = vmatprep.subr.bf16.mxu0 0
    %975 = vmatpush1.bf16.msra.mxu0 %v513
    %976 = vmatprep.mubr.bf16.mxu0 %v861
    %977 = vmatmul.mubr.bf16.gmra.mrb[0].mxu0 %v860
    %v978 = vpop.f32.mrb[0].mxu0
    %v979 = vadd.f32 %v939, %v978
    %v980 = vpop.f32.mrb[0].mxu0
    %v981 = vpop.f32.mrb[0].mxu0
    %v982 = vpop.f32.mrb[0].mxu0
    %983 = vdwg.mxu0
    %984 = vmatprep.subr.bf16.mxu0 0
    %985 = vmatpush1.bf16.msra.mxu0 %v514
    %986 = vmatprep.subr.bf16.mxu0 0
    %987 = vmatpush1.bf16.msra.mxu0 %v515
    %988 = vmatprep.subr.bf16.mxu0 0
    %989 = vmatpush1.bf16.msra.mxu0 %v516
    %990 = vmatprep.subr.bf16.mxu0 0
    %991 = vmatpush1.bf16.msra.mxu0 %v517
    %992 = vmatprep.subr.bf16.mxu0 0
    %993 = vmatpush1.bf16.msra.mxu0 %v518
    %994 = vmatprep.subr.bf16.mxu0 0
    %995 = vmatpush1.bf16.msra.mxu0 %v519
    %996 = vmatprep.subr.bf16.mxu0 0
    %997 = vmatpush1.bf16.msra.mxu0 %v520
    %998 = vmatprep.subr.bf16.mxu0 0
    %999 = vmatpush1.bf16.msra.mxu0 %v521
    %1000 = vmatprep.subr.bf16.mxu0 0
    %1001 = vmatpush1.bf16.msra.mxu0 %v522
    %1002 = vmatprep.subr.bf16.mxu0 0
    %1003 = vmatpush1.bf16.msra.mxu0 %v523
    %1004 = vmatprep.subr.bf16.mxu0 0
    %1005 = vmatpush1.bf16.msra.mxu0 %v524
    %1006 = vmatprep.subr.bf16.mxu0 0
    %1007 = vmatpush1.bf16.msra.mxu0 %v525
    %1008 = vmatprep.subr.bf16.mxu0 0
    %1009 = vmatpush1.bf16.msra.mxu0 %v526
    %1010 = vmatprep.subr.bf16.mxu0 0
    %1011 = vmatpush1.bf16.msra.mxu0 %v527
    %1012 = vmatprep.subr.bf16.mxu0 0
    %1013 = vmatpush1.bf16.msra.mxu0 %v528
    %1014 = vmatprep.subr.bf16.mxu0 0
    %1015 = vmatpush1.bf16.msra.mxu0 %v529
    %1016 = vmatprep.mubr.bf16.mxu0 %v863
    %1017 = vmatmul.mubr.bf16.gmra.mrb[0].mxu0 %v862
    %v1018 = vpop.f32.mrb[0].mxu0
    %v1019 = vadd.f32 %v979, %v1018
    %v1020 = vpop.f32.mrb[0].mxu0
    %v1021 = vpop.f32.mrb[0].mxu0
    %v1022 = vpop.f32.mrb[0].mxu0
    %1023 = vdwg.mxu0
    %v1024 = vmul.f32 %v1019, 0.1
    %v1025 = vadd.f32 %v749, %v1024
    %v1026 = vsel %vm754, %v1025, -inf
    %1027 = vmax.xlane.f32.xlu0 %v1026
    %v1028 = vpop.xlane.xlu0 %1027
    %v1029 = vsub.f32 %v1025, %v1028
    %v1030 = vmul.f32 %v1029, 1.442695
    %v1031 = vpow.pop %v1030
    %v1032 = vsel %vm754, %v1031, 0.0
    %1033 = vadd.xlane.f32.xlu0 %v1032
    %v1034 = vpop.xlane.xlu0 %1033
    %v1035 = vlog2.pop %v1034
    %v1036 = vmul.f32 %v1035, 0.6931472
    %v1037 = vsub.f32 %v1029, %v1036
    %v1038 = vmul.f32 %v1037, 1.442695
    %v1039 = vpow.pop %v1038
    %v1040 = vsub.f32 %v1039, %v768
    %v1041 = vmul.f32 %v1040, 0.5
    %v1042 = vpack.c.bf16 %v1041, %v1041
    %vm1043 = vcmask 80896
    %v1045 = vsel %vm1043, %v1042, 0
    %v1048 = vsel %vm1043, %v466, 0
    %v1051 = vsel %vm1043, %v467, 0
    %v1054 = vsel %vm1043, %v468, 0
    %v1057 = vsel %vm1043, %v469, 0
    %v1060 = vsel %vm1043, %v470, 0
    %v1063 = vsel %vm1043, %v471, 0
    %v1066 = vsel %vm1043, %v472, 0
    %v1069 = vsel %vm1043, %v473, 0
    %v1072 = vsel %vm1043, %v474, 0
    %v1075 = vsel %vm1043, %v475, 0
    %v1078 = vsel %vm1043, %v476, 0
    %v1081 = vsel %vm1043, %v477, 0
    %v1084 = vsel %vm1043, %v478, 0
    %v1087 = vsel %vm1043, %v479, 0
    %v1090 = vsel %vm1043, %v480, 0
    %v1093 = vsel %vm1043, %v481, 0
    %v1096 = vsel %vm1043, %v482, 0
    %v1099 = vsel %vm1043, %v483, 0
    %v1102 = vsel %vm1043, %v484, 0
    %v1105 = vsel %vm1043, %v485, 0
    %v1108 = vsel %vm1043, %v486, 0
    %v1111 = vsel %vm1043, %v487, 0
    %v1114 = vsel %vm1043, %v488, 0
    %v1117 = vsel %vm1043, %v489, 0
    %v1120 = vsel %vm1043, %v490, 0
    %v1123 = vsel %vm1043, %v491, 0
    %v1126 = vsel %vm1043, %v492, 0
    %v1129 = vsel %vm1043, %v493, 0
    %v1132 = vsel %vm1043, %v494, 0
    %v1135 = vsel %vm1043, %v495, 0
    %v1138 = vsel %vm1043, %v496, 0
    %v1141 = vsel %vm1043, %v497, 0
    %v1144 = vsel %vm1043, %v498, 0
    %v1147 = vsel %vm1043, %v499, 0
    %v1150 = vsel %vm1043, %v500, 0
    %v1153 = vsel %vm1043, %v501, 0
    %v1156 = vsel %vm1043, %v502, 0
    %v1159 = vsel %vm1043, %v503, 0
    %v1162 = vsel %vm1043, %v504, 0
    %v1165 = vsel %vm1043, %v505, 0
    %v1168 = vsel %vm1043, %v506, 0
    %v1171 = vsel %vm1043, %v507, 0
    %v1174 = vsel %vm1043, %v508, 0
    %v1177 = vsel %vm1043, %v509, 0
    %v1180 = vsel %vm1043, %v510, 0
    %v1183 = vsel %vm1043, %v511, 0
    %v1186 = vsel %vm1043, %v512, 0
    %v1189 = vsel %vm1043, %v513, 0
    %v1192 = vsel %vm1043, %v514, 0
    %v1195 = vsel %vm1043, %v515, 0
    %v1198 = vsel %vm1043, %v516, 0
    %v1201 = vsel %vm1043, %v517, 0
    %v1204 = vsel %vm1043, %v518, 0
    %v1207 = vsel %vm1043, %v519, 0
    %v1210 = vsel %vm1043, %v520, 0
    %v1213 = vsel %vm1043, %v521, 0
    %v1216 = vsel %vm1043, %v522, 0
    %v1219 = vsel %vm1043, %v523, 0
    %v1222 = vsel %vm1043, %v524, 0
    %v1225 = vsel %vm1043, %v525, 0
    %v1228 = vsel %vm1043, %v526, 0
    %v1231 = vsel %vm1043, %v527, 0
    %v1234 = vsel %vm1043, %v528, 0
    %v1237 = vsel %vm1043, %v529, 0
    %1239 = vmatprep.subr.bf16.mxu0 0
    %1240 = vmatpush1.bf16.xpose.msra.mxu0 %v1048
    %1241 = vmatprep.subr.bf16.mxu0 0
    %1242 = vmatpush1.bf16.xpose.msra.mxu0 %v1051
    %1243 = vmatprep.subr.bf16.mxu0 0
    %1244 = vmatpush1.bf16.xpose.msra.mxu0 %v1054
    %1245 = vmatprep.subr.bf16.mxu0 0
    %1246 = vmatpush1.bf16.xpose.msra.mxu0 %v1057
    %1247 = vmatprep.subr.bf16.mxu0 0
    %1248 = vmatpush1.bf16.xpose.msra.mxu0 %v1060
    %1249 = vmatprep.subr.bf16.mxu0 0
    %1250 = vmatpush1.bf16.xpose.msra.mxu0 %v1063
    %1251 = vmatprep.subr.bf16.mxu0 0
    %1252 = vmatpush1.bf16.xpose.msra.mxu0 %v1066
    %1253 = vmatprep.subr.bf16.mxu0 0
    %1254 = vmatpush1.bf16.xpose.msra.mxu0 %v1069
    %1255 = vmatprep.subr.bf16.mxu0 0
    %1256 = vmatpush1.bf16.xpose.msra.mxu0 %v1072
    %1257 = vmatprep.subr.bf16.mxu0 0
    %1258 = vmatpush1.bf16.xpose.msra.mxu0 %v1075
    %1259 = vmatprep.subr.bf16.mxu0 0
    %1260 = vmatpush1.bf16.xpose.msra.mxu0 %v1078
    %1261 = vmatprep.subr.bf16.mxu0 0
    %1262 = vmatpush1.bf16.xpose.msra.mxu0 %v1081
    %1263 = vmatprep.subr.bf16.mxu0 0
    %1264 = vmatpush1.bf16.xpose.msra.mxu0 %v1084
    %1265 = vmatprep.subr.bf16.mxu0 0
    %1266 = vmatpush1.bf16.xpose.msra.mxu0 %v1087
    %1267 = vmatprep.subr.bf16.mxu0 0
    %1268 = vmatpush1.bf16.xpose.msra.mxu0 %v1090
    %1269 = vmatprep.subr.bf16.mxu0 0
    %1270 = vmatpush1.bf16.xpose.msra.mxu0 %v1093
    %1271 = vmatprep.mubr.bf16.mxu0 0
    %1272 = vmatmul.mubr.bf16.gmra.mrb[0].mxu0 %v1045
    %v1273 = vpop.f32.mrb[0].mxu0
    %v1274 = vadd.f32 0.0, %v1273
    %v1275 = vpop.f32.mrb[0].mxu0
    %v1276 = vadd.f32 0.0, %v1275
    %v1277 = vpop.f32.mrb[0].mxu0
    %v1278 = vpop.f32.mrb[0].mxu0
    %1279 = vdwg.mxu0
    %1280 = vmatprep.subr.bf16.mxu0 0
    %1281 = vmatpush1.bf16.xpose.msra.mxu0 %v1096
    %1282 = vmatprep.subr.bf16.mxu0 0
    %1283 = vmatpush1.bf16.xpose.msra.mxu0 %v1099
    %1284 = vmatprep.subr.bf16.mxu0 0
    %1285 = vmatpush1.bf16.xpose.msra.mxu0 %v1102
    %1286 = vmatprep.subr.bf16.mxu0 0
    %1287 = vmatpush1.bf16.xpose.msra.mxu0 %v1105
    %1288 = vmatprep.subr.bf16.mxu0 0
    %1289 = vmatpush1.bf16.xpose.msra.mxu0 %v1108
    %1290 = vmatprep.subr.bf16.mxu0 0
    %1291 = vmatpush1.bf16.xpose.msra.mxu0 %v1111
    %1292 = vmatprep.subr.bf16.mxu0 0
    %1293 = vmatpush1.bf16.xpose.msra.mxu0 %v1114
    %1294 = vmatprep.subr.bf16.mxu0 0
    %1295 = vmatpush1.bf16.xpose.msra.mxu0 %v1117
    %1296 = vmatprep.subr.bf16.mxu0 0
    %1297 = vmatpush1.bf16.xpose.msra.mxu0 %v1120
    %1298 = vmatprep.subr.bf16.mxu0 0
    %1299 = vmatpush1.bf16.xpose.msra.mxu0 %v1123
    %1300 = vmatprep.subr.bf16.mxu0 0
    %1301 = vmatpush1.bf16.xpose.msra.mxu0 %v1126
    %1302 = vmatprep.subr.bf16.mxu0 0
    %1303 = vmatpush1.bf16.xpose.msra.mxu0 %v1129
    %1304 = vmatprep.subr.bf16.mxu0 0
    %1305 = vmatpush1.bf16.xpose.msra.mxu0 %v1132
    %1306 = vmatprep.subr.bf16.mxu0 0
    %1307 = vmatpush1.bf16.xpose.msra.mxu0 %v1135
    %1308 = vmatprep.subr.bf16.mxu0 0
    %1309 = vmatpush1.bf16.xpose.msra.mxu0 %v1138
    %1310 = vmatprep.subr.bf16.mxu0 0
    %1311 = vmatpush1.bf16.xpose.msra.mxu0 %v1141
    %1312 = vmatprep.mubr.bf16.mxu0 0
    %1313 = vmatmul.mubr.bf16.gmra.mrb[0].mxu0 %v1045
    %v1314 = vpop.f32.mrb[0].mxu0
    %v1315 = vadd.f32 0.0, %v1314
    %v1316 = vpop.f32.mrb[0].mxu0
    %v1317 = vadd.f32 0.0, %v1316
    %v1318 = vpop.f32.mrb[0].mxu0
    %v1319 = vpop.f32.mrb[0].mxu0
    %1320 = vdwg.mxu0
    %1321 = vmatprep.subr.bf16.mxu0 0
    %1322 = vmatpush1.bf16.xpose.msra.mxu0 %v1144
    %1323 = vmatprep.subr.bf16.mxu0 0
    %1324 = vmatpush1.bf16.xpose.msra.mxu0 %v1147
    %1325 = vmatprep.subr.bf16.mxu0 0
    %1326 = vmatpush1.bf16.xpose.msra.mxu0 %v1150
    %1327 = vmatprep.subr.bf16.mxu0 0
    %1328 = vmatpush1.bf16.xpose.msra.mxu0 %v1153
    %1329 = vmatprep.subr.bf16.mxu0 0
    %1330 = vmatpush1.bf16.xpose.msra.mxu0 %v1156
    %1331 = vmatprep.subr.bf16.mxu0 0
    %1332 = vmatpush1.bf16.xpose.msra.mxu0 %v1159
    %1333 = vmatprep.subr.bf16.mxu0 0
    %1334 = vmatpush1.bf16.xpose.msra.mxu0 %v1162
    %1335 = vmatprep.subr.bf16.mxu0 0
    %1336 = vmatpush1.bf16.xpose.msra.mxu0 %v1165
    %1337 = vmatprep.subr.bf16.mxu0 0
    %1338 = vmatpush1.bf16.xpose.msra.mxu0 %v1168
    %1339 = vmatprep.subr.bf16.mxu0 0
    %1340 = vmatpush1.bf16.xpose.msra.mxu0 %v1171
    %1341 = vmatprep.subr.bf16.mxu0 0
    %1342 = vmatpush1.bf16.xpose.msra.mxu0 %v1174
    %1343 = vmatprep.subr.bf16.mxu0 0
    %1344 = vmatpush1.bf16.xpose.msra.mxu0 %v1177
    %1345 = vmatprep.subr.bf16.mxu0 0
    %1346 = vmatpush1.bf16.xpose.msra.mxu0 %v1180
    %1347 = vmatprep.subr.bf16.mxu0 0
    %1348 = vmatpush1.bf16.xpose.msra.mxu0 %v1183
    %1349 = vmatprep.subr.bf16.mxu0 0
    %1350 = vmatpush1.bf16.xpose.msra.mxu0 %v1186
    %1351 = vmatprep.subr.bf16.mxu0 0
    %1352 = vmatpush1.bf16.xpose.msra.mxu0 %v1189
    %1353 = vmatprep.mubr.bf16.mxu0 0
    %1354 = vmatmul.mubr.bf16.gmra.mrb[0].mxu0 %v1045
    %v1355 = vpop.f32.mrb[0].mxu0
    %v1356 = vadd.f32 0.0, %v1355
    %v1357 = vpop.f32.mrb[0].mxu0
    %v1358 = vadd.f32 0.0, %v1357
    %v1359 = vpop.f32.mrb[0].mxu0
    %v1360 = vpop.f32.mrb[0].mxu0
    %1361 = vdwg.mxu0
    %1362 = vmatprep.subr.bf16.mxu0 0
    %1363 = vmatpush1.bf16.xpose.msra.mxu0 %v1192
    %1364 = vmatprep.subr.bf16.mxu0 0
    %1365 = vmatpush1.bf16.xpose.msra.mxu0 %v1195
    %1366 = vmatprep.subr.bf16.mxu0 0
    %1367 = vmatpush1.bf16.xpose.msra.mxu0 %v1198
    %1368 = vmatprep.subr.bf16.mxu0 0
    %1369 = vmatpush1.bf16.xpose.msra.mxu0 %v1201
    %1370 = vmatprep.subr.bf16.mxu0 0
    %1371 = vmatpush1.bf16.xpose.msra.mxu0 %v1204
    %1372 = vmatprep.subr.bf16.mxu0 0
    %1373 = vmatpush1.bf16.xpose.msra.mxu0 %v1207
    %1374 = vmatprep.subr.bf16.mxu0 0
    %1375 = vmatpush1.bf16.xpose.msra.mxu0 %v1210
    %1376 = vmatprep.subr.bf16.mxu0 0
    %1377 = vmatpush1.bf16.xpose.msra.mxu0 %v1213
    %1378 = vmatprep.subr.bf16.mxu0 0
    %1379 = vmatpush1.bf16.xpose.msra.mxu0 %v1216
    %1380 = vmatprep.subr.bf16.mxu0 0
    %1381 = vmatpush1.bf16.xpose.msra.mxu0 %v1219
    %1382 = vmatprep.subr.bf16.mxu0 0
    %1383 = vmatpush1.bf16.xpose.msra.mxu0 %v1222
    %1384 = vmatprep.subr.bf16.mxu0 0
    %1385 = vmatpush1.bf16.xpose.msra.mxu0 %v1225
    %1386 = vmatprep.subr.bf16.mxu0 0
    %1387 = vmatpush1.bf16.xpose.msra.mxu0 %v1228
    %1388 = vmatprep.subr.bf16.mxu0 0
    %1389 = vmatpush1.bf16.xpose.msra.mxu0 %v1231
    %1390 = vmatprep.subr.bf16.mxu0 0
    %1391 = vmatpush1.bf16.xpose.msra.mxu0 %v1234
    %1392 = vmatprep.subr.bf16.mxu0 0
    %1393 = vmatpush1.bf16.xpose.msra.mxu0 %v1237
    %1394 = vmatprep.mubr.bf16.mxu0 0
    %1395 = vmatmul.mubr.bf16.gmra.mrb[0].mxu0 %v1045
    %v1396 = vpop.f32.mrb[0].mxu0
    %v1397 = vadd.f32 0.0, %v1396
    %v1398 = vpop.f32.mrb[0].mxu0
    %v1399 = vadd.f32 0.0, %v1398
    %v1400 = vpop.f32.mrb[0].mxu0
    %v1401 = vpop.f32.mrb[0].mxu0
    %1402 = vdwg.mxu0
    %v1403 = vmul.f32 %v1274, %v1274
    %v1404 = vmul.f32 %v1276, %v1276
    %v1405 = vmul.f32 %v1315, %v1315
    %v1406 = vmul.f32 %v1317, %v1317
    %v1407 = vadd.f32 %v1403, %v1405
    %v1408 = vadd.f32 %v1404, %v1406
    %v1409 = vmul.f32 %v1356, %v1356
    %v1410 = vmul.f32 %v1358, %v1358
    %v1411 = vadd.f32 %v1407, %v1409
    %v1412 = vadd.f32 %v1408, %v1410
    %v1413 = vmul.f32 %v1397, %v1397
    %v1414 = vmul.f32 %v1399, %v1399
    %v1415 = vadd.f32 %v1411, %v1413
    %v1416 = vadd.f32 %v1412, %v1414
    %v1417 = vrsqrt.pop %v1415
    %v1418 = vmul.f32 %v1415, %v1417
    %vm1419 = vcmp.eq.f32.partialorder %v1415, inf
    %v1420 = vsel %vm1419, %v1415, %v1418
    %vm1421 = vcmp.eq.f32.partialorder %v1415, 0.0
    %v1422 = vand.u32 %v1415, 2147483648
    %v1423 = vsel %vm1421, %v1422, %v1420
    %v1424 = vrsqrt.pop %v1416
    %v1425 = vmul.f32 %v1416, %v1424
    %vm1426 = vcmp.eq.f32.partialorder %v1416, inf
    %v1427 = vsel %vm1426, %v1416, %v1425
    %vm1428 = vcmp.eq.f32.partialorder %v1416, 0.0
    %v1429 = vand.u32 %v1416, 2147483648
    %v1430 = vsel %vm1428, %v1429, %v1427
    %v1431 = vmax.f32 %v1423, 1e-12
    %v1432 = vmax.f32 %v1430, 1e-12
    %v1433 = vrcp.pop %v1431
    %v1434 = vrcp.pop %v1432
    %v1435 = vmul.f32 %v1274, %v1433
    %v1436 = vmul.f32 %v1276, %v1434
    %v1437 = vmul.f32 %v1315, %v1433
    %v1438 = vmul.f32 %v1317, %v1434
    %v1439 = vmul.f32 %v1356, %v1433
    %v1440 = vmul.f32 %v1358, %v1434
    %v1441 = vmul.f32 %v1397, %v1433
    %v1442 = vmul.f32 %v1399, %v1434
    %v1443 = vpack.c.bf16 %v1435, %v1435
    %v1444 = vpack.c.bf16 %v1436, %v1436
    %v1445 = vpack.c.bf16 %v1437, %v1437
    %v1446 = vpack.c.bf16 %v1438, %v1438
    %v1447 = vpack.c.bf16 %v1439, %v1439
    %v1448 = vpack.c.bf16 %v1440, %v1440
    %v1449 = vpack.c.bf16 %v1441, %v1441
    %v1450 = vpack.c.bf16 %v1442, %v1442
    %1451 = vmatprep.subr.bf16.mxu0 0
    %1452 = vmatpush1.bf16.msra.mxu0 %v466
    %1453 = vmatprep.subr.bf16.mxu0 0
    %1454 = vmatpush1.bf16.msra.mxu0 %v467
    %1455 = vmatprep.subr.bf16.mxu0 0
    %1456 = vmatpush1.bf16.msra.mxu0 %v468
    %1457 = vmatprep.subr.bf16.mxu0 0
    %1458 = vmatpush1.bf16.msra.mxu0 %v469
    %1459 = vmatprep.subr.bf16.mxu0 0
    %1460 = vmatpush1.bf16.msra.mxu0 %v470
    %1461 = vmatprep.subr.bf16.mxu0 0
    %1462 = vmatpush1.bf16.msra.mxu0 %v471
    %1463 = vmatprep.subr.bf16.mxu0 0
    %1464 = vmatpush1.bf16.msra.mxu0 %v472
    %1465 = vmatprep.subr.bf16.mxu0 0
    %1466 = vmatpush1.bf16.msra.mxu0 %v473
    %1467 = vmatprep.subr.bf16.mxu0 0
    %1468 = vmatpush1.bf16.msra.mxu0 %v474
    %1469 = vmatprep.subr.bf16.mxu0 0
    %1470 = vmatpush1.bf16.msra.mxu0 %v475
    %1471 = vmatprep.subr.bf16.mxu0 0
    %1472 = vmatpush1.bf16.msra.mxu0 %v476
    %1473 = vmatprep.subr.bf16.mxu0 0
    %1474 = vmatpush1.bf16.msra.mxu0 %v477
    %1475 = vmatprep.subr.bf16.mxu0 0
    %1476 = vmatpush1.bf16.msra.mxu0 %v478
    %1477 = vmatprep.subr.bf16.mxu0 0
    %1478 = vmatpush1.bf16.msra.mxu0 %v479
    %1479 = vmatprep.subr.bf16.mxu0 0
    %1480 = vmatpush1.bf16.msra.mxu0 %v480
    %1481 = vmatprep.subr.bf16.mxu0 0
    %1482 = vmatpush1.bf16.msra.mxu0 %v481
    %1483 = vmatprep.mubr.bf16.mxu0 %v1444
    %1484 = vmatmul.mubr.bf16.gmra.mrb[0].mxu0 %v1443
    %v1485 = vpop.f32.mrb[0].mxu0
    %v1486 = vadd.f32 0.0, %v1485
    %v1487 = vpop.f32.mrb[0].mxu0
    %v1488 = vpop.f32.mrb[0].mxu0
    %v1489 = vpop.f32.mrb[0].mxu0
    %1490 = vdwg.mxu0
    %1491 = vmatprep.subr.bf16.mxu0 0
    %1492 = vmatpush1.bf16.msra.mxu0 %v482
    %1493 = vmatprep.subr.bf16.mxu0 0
    %1494 = vmatpush1.bf16.msra.mxu0 %v483
    %1495 = vmatprep.subr.bf16.mxu0 0
    %1496 = vmatpush1.bf16.msra.mxu0 %v484
    %1497 = vmatprep.subr.bf16.mxu0 0
    %1498 = vmatpush1.bf16.msra.mxu0 %v485
    %1499 = vmatprep.subr.bf16.mxu0 0
    %1500 = vmatpush1.bf16.msra.mxu0 %v486
    %1501 = vmatprep.subr.bf16.mxu0 0
    %1502 = vmatpush1.bf16.msra.mxu0 %v487
    %1503 = vmatprep.subr.bf16.mxu0 0
    %1504 = vmatpush1.bf16.msra.mxu0 %v488
    %1505 = vmatprep.subr.bf16.mxu0 0
    %1506 = vmatpush1.bf16.msra.mxu0 %v489
    %1507 = vmatprep.subr.bf16.mxu0 0
    %1508 = vmatpush1.bf16.msra.mxu0 %v490
    %1509 = vmatprep.subr.bf16.mxu0 0
    %1510 = vmatpush1.bf16.msra.mxu0 %v491
    %1511 = vmatprep.subr.bf16.mxu0 0
    %1512 = vmatpush1.bf16.msra.mxu0 %v492
    %1513 = vmatprep.subr.bf16.mxu0 0
    %1514 = vmatpush1.bf16.msra.mxu0 %v493
    %1515 = vmatprep.subr.bf16.mxu0 0
    %1516 = vmatpush1.bf16.msra.mxu0 %v494
    %1517 = vmatprep.subr.bf16.mxu0 0
    %1518 = vmatpush1.bf16.msra.mxu0 %v495
    %1519 = vmatprep.subr.bf16.mxu0 0
    %1520 = vmatpush1.bf16.msra.mxu0 %v496
    %1521 = vmatprep.subr.bf16.mxu0 0
    %1522 = vmatpush1.bf16.msra.mxu0 %v497
    %1523 = vmatprep.mubr.bf16.mxu0 %v1446
    %1524 = vmatmul.mubr.bf16.gmra.mrb[0].mxu0 %v1445
    %v1525 = vpop.f32.mrb[0].mxu0
    %v1526 = vadd.f32 %v1486, %v1525
    %v1527 = vpop.f32.mrb[0].mxu0
    %v1528 = vpop.f32.mrb[0].mxu0
    %v1529 = vpop.f32.mrb[0].mxu0
    %1530 = vdwg.mxu0
    %1531 = vmatprep.subr.bf16.mxu0 0
    %1532 = vmatpush1.bf16.msra.mxu0 %v498
    %1533 = vmatprep.subr.bf16.mxu0 0
    %1534 = vmatpush1.bf16.msra.mxu0 %v499
    %1535 = vmatprep.subr.bf16.mxu0 0
    %1536 = vmatpush1.bf16.msra.mxu0 %v500
    %1537 = vmatprep.subr.bf16.mxu0 0
    %1538 = vmatpush1.bf16.msra.mxu0 %v501
    %1539 = vmatprep.subr.bf16.mxu0 0
    %1540 = vmatpush1.bf16.msra.mxu0 %v502
    %1541 = vmatprep.subr.bf16.mxu0 0
    %1542 = vmatpush1.bf16.msra.mxu0 %v503
    %1543 = vmatprep.subr.bf16.mxu0 0
    %1544 = vmatpush1.bf16.msra.mxu0 %v504
    %1545 = vmatprep.subr.bf16.mxu0 0
    %1546 = vmatpush1.bf16.msra.mxu0 %v505
    %1547 = vmatprep.subr.bf16.mxu0 0
    %1548 = vmatpush1.bf16.msra.mxu0 %v506
    %1549 = vmatprep.subr.bf16.mxu0 0
    %1550 = vmatpush1.bf16.msra.mxu0 %v507
    %1551 = vmatprep.subr.bf16.mxu0 0
    %1552 = vmatpush1.bf16.msra.mxu0 %v508
    %1553 = vmatprep.subr.bf16.mxu0 0
    %1554 = vmatpush1.bf16.msra.mxu0 %v509
    %1555 = vmatprep.subr.bf16.mxu0 0
    %1556 = vmatpush1.bf16.msra.mxu0 %v510
    %1557 = vmatprep.subr.bf16.mxu0 0
    %1558 = vmatpush1.bf16.msra.mxu0 %v511
    %1559 = vmatprep.subr.bf16.mxu0 0
    %1560 = vmatpush1.bf16.msra.mxu0 %v512
    %1561 = vmatprep.subr.bf16.mxu0 0
    %1562 = vmatpush1.bf16.msra.mxu0 %v513
    %1563 = vmatprep.mubr.bf16.mxu0 %v1448
    %1564 = vmatmul.mubr.bf16.gmra.mrb[0].mxu0 %v1447
    %v1565 = vpop.f32.mrb[0].mxu0
    %v1566 = vadd.f32 %v1526, %v1565
    %v1567 = vpop.f32.mrb[0].mxu0
    %v1568 = vpop.f32.mrb[0].mxu0
    %v1569 = vpop.f32.mrb[0].mxu0
    %1570 = vdwg.mxu0
    %1571 = vmatprep.subr.bf16.mxu0 0
    %1572 = vmatpush1.bf16.msra.mxu0 %v514
    %1573 = vmatprep.subr.bf16.mxu0 0
    %1574 = vmatpush1.bf16.msra.mxu0 %v515
    %1575 = vmatprep.subr.bf16.mxu0 0
    %1576 = vmatpush1.bf16.msra.mxu0 %v516
    %1577 = vmatprep.subr.bf16.mxu0 0
    %1578 = vmatpush1.bf16.msra.mxu0 %v517
    %1579 = vmatprep.subr.bf16.mxu0 0
    %1580 = vmatpush1.bf16.msra.mxu0 %v518
    %1581 = vmatprep.subr.bf16.mxu0 0
    %1582 = vmatpush1.bf16.msra.mxu0 %v519
    %1583 = vmatprep.subr.bf16.mxu0 0
    %1584 = vmatpush1.bf16.msra.mxu0 %v520
    %1585 = vmatprep.subr.bf16.mxu0 0
    %1586 = vmatpush1.bf16.msra.mxu0 %v521
    %1587 = vmatprep.subr.bf16.mxu0 0
    %1588 = vmatpush1.bf16.msra.mxu0 %v522
    %1589 = vmatprep.subr.bf16.mxu0 0
    %1590 = vmatpush1.bf16.msra.mxu0 %v523
    %1591 = vmatprep.subr.bf16.mxu0 0
    %1592 = vmatpush1.bf16.msra.mxu0 %v524
    %1593 = vmatprep.subr.bf16.mxu0 0
    %1594 = vmatpush1.bf16.msra.mxu0 %v525
    %1595 = vmatprep.subr.bf16.mxu0 0
    %1596 = vmatpush1.bf16.msra.mxu0 %v526
    %1597 = vmatprep.subr.bf16.mxu0 0
    %1598 = vmatpush1.bf16.msra.mxu0 %v527
    %1599 = vmatprep.subr.bf16.mxu0 0
    %1600 = vmatpush1.bf16.msra.mxu0 %v528
    %1601 = vmatprep.subr.bf16.mxu0 0
    %1602 = vmatpush1.bf16.msra.mxu0 %v529
    %1603 = vmatprep.mubr.bf16.mxu0 %v1450
    %1604 = vmatmul.mubr.bf16.gmra.mrb[0].mxu0 %v1449
    %v1605 = vpop.f32.mrb[0].mxu0
    %v1606 = vadd.f32 %v1566, %v1605
    %v1607 = vpop.f32.mrb[0].mxu0
    %v1608 = vpop.f32.mrb[0].mxu0
    %v1609 = vpop.f32.mrb[0].mxu0
    %1610 = vdwg.mxu0
    %v1611 = vmul.f32 %v1606, 0.1
    %v1612 = vadd.f32 %v749, %v1611
    %v1613 = vsel %vm754, %v1612, -inf
    %1614 = vmax.xlane.f32.xlu0 %v1613
    %v1615 = vpop.xlane.xlu0 %1614
    %v1616 = vsub.f32 %v1612, %v1615
    %v1617 = vmul.f32 %v1616, 1.442695
    %v1618 = vpow.pop %v1617
    %v1619 = vsel %vm754, %v1618, 0.0
    %1620 = vadd.xlane.f32.xlu0 %v1619
    %v1621 = vpop.xlane.xlu0 %1620
    %v1622 = vlog2.pop %v1621
    %v1623 = vmul.f32 %v1622, 0.6931472
    %v1624 = vsub.f32 %v1616, %v1623
    %v1625 = vsub.f32 %v766, %v1624
    %v1626 = vmul.f32 %v768, %v1625
    %v1627 = vsel %vm754, %v1626, 0.0
    %1628 = vadd.xlane.f32.xlu0 %v1627
    %v1629 = vpop.xlane.xlu0 %1628
    %v1630 = vrot.slane %v1629, 4
    %v1631 = vadd.f32 %v1629, %v1630
    %v1632 = vrot.slane %v1631, 2
    %v1633 = vadd.f32 %v1631, %v1632
    %v1634 = vrot.slane %v1633, 1
    %v1635 = vadd.f32 %v1633, %v1634
    %s1636 = vtos %v1635
    %v1637 = vstv %s1636
    %1638 = vst [vmem:[#allocation2] sm:$0x1] %v1637
    // Predicated region
    $region18: #{tpu_custom_call.1} parent=1 // pred_check
      _
    $region19: #{tpu_custom_call.1} parent=1 // pred_check_branch
      %1640 = sbr.rel (0) target = $region21
    $region20: #{tpu_custom_call.1} parent=1 // pred_region
      %s1642 = ssub.s32 16, 16
      %1643 = vsyncadd [#allocation3], %s1642
      %s1645 = sshll.u32 [#allocation2], 4
      %s1646 = int_to_ptr.vmem [resolvable:$true] %s1645
      %1648 = dma.vmem_to_hbm [thread:$0]  %s1646, 16, %s4, [#allocation3]
    $region21: #{tpu_custom_call.1} parent=1 // pred_fallthru
      _
    // Predicated region
    $region22: #{tpu_custom_call.1} parent=1 // pred_check
      _
    $region23: #{tpu_custom_call.1} parent=1 // pred_check_branch
      %1650 = sbr.rel (0) target = $region25
    $region24: #{tpu_custom_call.1} parent=1 // pred_region
      %1651 = dma.done [#allocation3], 16
    $region25: #{tpu_custom_call.1} parent=1 // pred_fallthru
      _
    %1652 = vsyncpa [#allocation3], 1

</llo_original>
